<compile_context>
chip_gen: v5e
topology: v5e:2x2
jax: 0.10.0
libtpu: 0.0.40
codegen_flags: <defaults>
</compile_context>

<pallas_src>
import functools

import jax
import jax.numpy as jnp
from jax.experimental import pallas as pl
from jax.experimental.pallas import tpu as pltpu


def _round_up(x, m):
    return ((x + m - 1) // m) * m


# ---------------------------------------------------------------------------
# Fused kernel: fc1 -> depthwise 3x3 conv -> ReLU -> fc2  (one token slab)
# ---------------------------------------------------------------------------
def _simple_mlp_kernel(x_ref, w1_ref, w2_ref, cw_ref, mask_ref, ebias_ref,
                       b2_ref, o_ref, pad_ref, *, W, pad_lo, m):
    # x_ref:    (M, D)  f32          w1: (D, Dh) bf16     w2: (Dh, D) bf16
    # cw_ref:   (9, 1, Dh) f32       mask_ref: (9, M, 1) f32
    # ebias:    (M, Dh) f32 (fc1 bias folded through conv + conv bias)
    # b2:       (1, D) f32           o_ref: (M, D) f32
    # pad_ref:  (pad_lo + M + pad_lo, Dh) f32 scratch (zero-padded token buffer)

    # ---- fc1 on the MXU: bf16 operands, f32 accumulation (bias is folded away)
    h = jnp.dot(x_ref[...].astype(jnp.bfloat16), w1_ref[...],
                preferred_element_type=jnp.float32)               # (M, Dh)
    dh = h.shape[1]

    # ---- Zero the padding strips once (scratch persists across grid steps).
    @pl.when(pl.program_id(0) == 0)
    def _():
        zeros = jnp.zeros((pad_lo, dh), jnp.float32)
        pad_ref[pl.ds(0, pad_lo), :] = zeros
        pad_ref[pl.ds(pad_lo + m, pad_lo), :] = zeros

    # ---- Stage h into the zero-padded token buffer (8-aligned store).
    pad_ref[pl.ds(pad_lo, m), :] = h

    # ---- Depthwise 3x3 conv over the HxW grid as 9 statically shifted,
    #      masked, per-channel-weighted reads (load + VPU slots only).
    #      mask[t] zeroes every out-of-grid neighbour, which also kills any
    #      cross-batch leakage of the flat-token shifts.
    acc = None
    t = 0
    for di in (-1, 0, 1):
        for dj in (-1, 0, 1):
            d = di * W + dj                                      # flat offset
            shifted = pad_ref[pl.ds(pad_lo + d, m), :]           # (M, Dh)
            term = (shifted * mask_ref[t]) * cw_ref[t]
            acc = term if acc is None else acc + term
            t += 1

    # conv bias + folded fc1 bias, then ReLU
    a = jnp.maximum(acc + ebias_ref[...], 0.0)

    # ---- fc2 on the MXU: bf16 operands, f32 accumulation
    y = jnp.dot(a.astype(jnp.bfloat16), w2_ref[...],
                preferred_element_type=jnp.float32) + b2_ref[...]
    o_ref[...] = y.astype(o_ref.dtype)


# ---------------------------------------------------------------------------
# Static (init-time) helpers
# ---------------------------------------------------------------------------
def _make_tap_masks(H, W):
    """mask[t, l, 0] = 1 iff the (di,dj) neighbour of token l lies inside the
    HxW grid (zero padding outside), with t = (di+1)*3 + (dj+1)."""
    L = H * W
    l = jnp.arange(L)
    i, j = l // W, l % W
    cols = []
    for di in (-1, 0, 1):
        for dj in (-1, 0, 1):
            valid = (i + di >= 0) & (i + di < H) & (j + dj >= 0) & (j + dj < W)
            cols.append(valid.astype(jnp.float32))
    return jnp.stack(cols).reshape(9, L, 1)


def init_params(key, dim, hidden, H, W):
    ks = jax.random.split(key, 6)
    w1 = 0.02 * jax.random.normal(ks[0], (dim, hidden), jnp.float32)
    b1 = 0.02 * jax.random.normal(ks[1], (1, hidden), jnp.float32)
    cw = 0.10 * jax.random.normal(ks[2], (9, 1, hidden), jnp.float32)
    cb = 0.02 * jax.random.normal(ks[3], (1, hidden), jnp.float32)
    w2 = 0.02 * jax.random.normal(ks[4], (hidden, dim), jnp.float32)
    b2 = 0.02 * jax.random.normal(ks[5], (1, dim), jnp.float32)

    mask = _make_tap_masks(H, W)                                  # (9, L, 1)
    # Fold fc1 bias through the depthwise conv + conv bias into one per-token
    # effective bias:  eff_bias[l,c] = cb[c] + b1[c] * sum_t mask[t,l]*cw[t,c]
    eff_bias = cb + b1 * jnp.einsum("tl,tc->lc", mask[..., 0], cw[:, 0, :])

    return {
        # bf16 copies feed the MXU; f32 originals kept for the reference check.
        "w1": w1.astype(jnp.bfloat16), "w2": w2.astype(jnp.bfloat16),
        "w1_f32": w1, "w2_f32": w2,
        "b1": b1, "cw": cw, "cb": cb, "b2": b2,
        "mask": mask, "eff_bias": eff_bias,
    }


# ---------------------------------------------------------------------------
# Forward wrapper (single fused pallas_call)
# ---------------------------------------------------------------------------
def simple_mlp_pallas(params, x, H, W, *, batch_block=None):
    B, L, D = x.shape
    assert L == H * W, "L must equal H*W (square token grid)"
    Dh = params["cw"].shape[-1]

    if batch_block is None:
        # Fold enough batch elements so M = batch_block*L >= ~128 (full MXU
        # rows on v5e, half-rows on v6e/v7x).  On v7x you may instead pass
        # batch_block = B // 2 to keep two "parallel" grid steps (2 TCs).
        target = max(1, -(-128 // L))
        batch_block = 1
        for cand in range(min(B, target), 0, -1):
            if B % cand == 0:
                batch_block = cand
                break
    assert B % batch_block == 0
    M = batch_block * L
    nsteps = B // batch_block
    pad_lo = _round_up(W + 1, 8)            # 8-aligned zero-padding strips

    # Lane-dense flat-token layout for the matmuls; tile the per-token tables
    # to the per-step token count (pattern repeats every L tokens).
    x2 = x.reshape(B * L, D)
    mask = jnp.tile(params["mask"], (1, batch_block, 1))          # (9, M, 1)
    ebias = jnp.tile(params["eff_bias"], (batch_block, 1))        # (M, Dh)

    kernel = functools.partial(_simple_mlp_kernel, W=W, pad_lo=pad_lo, m=M)

    flops = 2 * B * L * D * Dh * 2 + 2 * 9 * B * L * Dh
    bytes_accessed = (2 * B * L * D) * 4 + (D * Dh + Dh * D) * 2 \
        + (9 * M + M * Dh + 9 * Dh + D) * 4

    out = pl.pallas_call(
        kernel,
        out_shape=jax.ShapeDtypeStruct((B * L, D), jnp.float32),
        grid_spec=pltpu.PrefetchScalarGridSpec(
            num_scalar_prefetch=0,
            grid=(nsteps,),
            in_specs=[
                pl.BlockSpec((M, D),     lambda i: (i, 0)),       # x tokens
                pl.BlockSpec((D, Dh),    lambda i: (0, 0)),       # w1 (bf16)
                pl.BlockSpec((Dh, D),    lambda i: (0, 0)),       # w2 (bf16)
                pl.BlockSpec((9, 1, Dh), lambda i: (0, 0, 0)),    # conv weights
                pl.BlockSpec((9, M, 1),  lambda i: (0, 0, 0)),    # tap masks
                pl.BlockSpec((M, Dh),    lambda i: (0, 0)),       # folded bias
                pl.BlockSpec((1, D),     lambda i: (0, 0)),       # b2
            ],
            out_specs=pl.BlockSpec((M, D), lambda i: (i, 0)),
            scratch_shapes=[
                pltpu.VMEM((pad_lo + M + pad_lo, Dh), jnp.float32),
            ],
        ),
        compiler_params=pltpu.CompilerParams(
            dimension_semantics=("parallel",)),
        cost_estimate=pl.CostEstimate(
            flops=flops, transcendentals=0, bytes_accessed=bytes_accessed),
    )(x2, params["w1"], params["w2"], params["cw"], mask, ebias, params["b2"])

    return out.reshape(B, L, D)


# ---------------------------------------------------------------------------
# Pure-JAX f32 reference (matches the PyTorch forward) for correctness check
# ---------------------------------------------------------------------------
def simple_mlp_reference(params, x, H, W):
    B, L, D = x.shape
    Dh = params["cw"].shape[-1]
    with jax.default_matmul_precision("float32"):
        h = x @ params["w1_f32"] + params["b1"]                   # (B, L, Dh)
        img = h.reshape(B, H, W, Dh)
        pad = jnp.pad(img, ((0, 0), (1, 1), (1, 1), (0, 0)))
        cw = params["cw"].reshape(3, 3, Dh)
        acc = jnp.zeros_like(img)
        for di in range(3):
            for dj in range(3):
                acc = acc + pad[:, di:di + H, dj:dj + W, :] * cw[di, dj]
        a = jnp.maximum(acc + params["cb"].reshape(Dh), 0.0)
        return a.reshape(B, L, Dh) @ params["w2_f32"] + params["b2"]


if __name__ == "__main__":
    key = jax.random.PRNGKey(0)
    k_x, k_p = jax.random.split(key)

    B, H, W = 2, 8, 8
    L = H * W                       # 64 tokens per image
    dim, hidden = 128, 128          # lane-dense channel dims

    x = jax.random.normal(k_x, (B, L, dim), jnp.float32)
    params = init_params(k_p, dim, hidden, H, W)

    out = simple_mlp_pallas(params, x, H, W)
    jax.block_until_ready(out)
    assert out.shape == (B, L, dim)

    ref = simple_mlp_reference(params, x, H, W)
    err = float(jnp.max(jnp.abs(out - ref)))
    assert bool(jnp.all(jnp.isfinite(out))), "non-finite output"
    # bf16 MXU operands with f32 accumulation -> loosened vs. pure-f32 (~1e-3).
    assert err < 1e-2, f"max abs err {err}"
    print("KERNEL_OK")
</pallas_src>

<mosaic_0001>
module attributes {stable_mosaic.version = 11 : i64} {
  func.func @_simple_mlp_kernel(%arg0: i32, %arg1: memref<128x128xf32, #tpu.memory_space<vmem>>, %arg2: memref<128x128xbf16, #tpu.memory_space<vmem>>, %arg3: memref<128x128xbf16, #tpu.memory_space<vmem>>, %arg4: memref<9x1x128xf32, #tpu.memory_space<vmem>>, %arg5: memref<9x128x1xf32, #tpu.memory_space<vmem>>, %arg6: memref<128x128xf32, #tpu.memory_space<vmem>>, %arg7: memref<1x128xf32, #tpu.memory_space<vmem>>, %arg8: memref<128x128xf32, #tpu.memory_space<vmem>>, %arg9: memref<160x128xf32, #tpu.memory_space<vmem>>) attributes {dimension_semantics = [#tpu.dimension_semantics<parallel>], iteration_bounds = array<i64: 1>, scalar_prefetch = 0 : i64, scratch_operands = 1 : i64, tpu.core_type = #tpu.core_type<tc>, window_params = [{transform_indices = @transform_0, window_bounds = array<i64: 128, 128>}, {pipeline_mode = #tpu.pipeline_mode<synchronous>, transform_indices = @transform_1, window_bounds = array<i64: 128, 128>}, {pipeline_mode = #tpu.pipeline_mode<synchronous>, transform_indices = @transform_2, window_bounds = array<i64: 128, 128>}, {pipeline_mode = #tpu.pipeline_mode<synchronous>, transform_indices = @transform_3, window_bounds = array<i64: 9, 1, 128>}, {pipeline_mode = #tpu.pipeline_mode<synchronous>, transform_indices = @transform_4, window_bounds = array<i64: 9, 128, 1>}, {pipeline_mode = #tpu.pipeline_mode<synchronous>, transform_indices = @transform_5, window_bounds = array<i64: 128, 128>}, {pipeline_mode = #tpu.pipeline_mode<synchronous>, transform_indices = @transform_6, window_bounds = array<i64: 1, 128>}, {transform_indices = @transform_7, window_bounds = array<i64: 128, 128>}]} {
    %c0 = arith.constant 0 : index
    %c0_0 = arith.constant 0 : index
    %0 = vector.load %arg1[%c0, %c0_0] : memref<128x128xf32, #tpu.memory_space<vmem>>, vector<128x128xf32>
    %1 = arith.truncf %0 : vector<128x128xf32> to vector<128x128xbf16>
    %c0_1 = arith.constant 0 : index
    %c0_2 = arith.constant 0 : index
    %2 = vector.load %arg2[%c0_1, %c0_2] : memref<128x128xbf16, #tpu.memory_space<vmem>>, vector<128x128xbf16>
    %cst = arith.constant dense<0.000000e+00> : vector<128x128xf32>
    %3 = tpu.matmul %1, %2, %cst {dimension_numbers = #tpu.dot_dimension_numbers<[1], [0], [0], [1], [0, 0, 1, 1], [], []>} : vector<128x128xbf16>, vector<128x128xbf16>, vector<128x128xf32> -> vector<128x128xf32>
    %c0_i32 = arith.constant 0 : i32
    %4 = arith.cmpi eq, %arg0, %c0_i32 : i32
    %5 = arith.extui %4 : i1 to i32
    %c0_i32_3 = arith.constant 0 : i32
    %6 = arith.cmpi ne, %5, %c0_i32_3 : i32
    scf.if %6 {
      %cst_73 = arith.constant 0.000000e+00 : f32
      %108 = vector.broadcast %cst_73 : f32 to vector<16x128xf32>
      %c0_74 = arith.constant 0 : index
      %c0_75 = arith.constant 0 : index
      %109 = vector.load %arg9[%c0_74, %c0_75] : memref<160x128xf32, #tpu.memory_space<vmem>>, vector<16x128xf32>
      tpu.vector_store %arg9[%c0_74, %c0_75], %108 {strides = array<i32>} : memref<160x128xf32, #tpu.memory_space<vmem>>, vector<16x128xf32>,
      %c144 = arith.constant 144 : index
      %c0_76 = arith.constant 0 : index
      %110 = vector.load %arg9[%c144, %c0_76] : memref<160x128xf32, #tpu.memory_space<vmem>>, vector<16x128xf32>
      tpu.vector_store %arg9[%c144, %c0_76], %108 {strides = array<i32>} : memref<160x128xf32, #tpu.memory_space<vmem>>, vector<16x128xf32>,
    } else {
    }
    %c16 = arith.constant 16 : index
    %c0_4 = arith.constant 0 : index
    %7 = vector.load %arg9[%c16, %c0_4] : memref<160x128xf32, #tpu.memory_space<vmem>>, vector<128x128xf32>
    tpu.vector_store %arg9[%c16, %c0_4], %3 {strides = array<i32>} : memref<160x128xf32, #tpu.memory_space<vmem>>, vector<128x128xf32>,
    %c7 = arith.constant 7 : index
    %c0_5 = arith.constant 0 : index
    %8 = vector.load %arg9[%c7, %c0_5] : memref<160x128xf32, #tpu.memory_space<vmem>>, vector<128x128xf32>
    %c0_6 = arith.constant 0 : index
    %c0_7 = arith.constant 0 : index
    %c0_8 = arith.constant 0 : index
    %9 = vector.load %arg5[%c0_6, %c0_7, %c0_8] : memref<9x128x1xf32, #tpu.memory_space<vmem>>, vector<1x128x1xf32>
    %10 = vector.shape_cast %9 : vector<1x128x1xf32> to vector<128x1xf32>
    %11 = vector.broadcast %10 : vector<128x1xf32> to vector<128x128xf32>
    %12 = arith.mulf %8, %11 : vector<128x128xf32>
    %c0_9 = arith.constant 0 : index
    %c0_10 = arith.constant 0 : index
    %c0_11 = arith.constant 0 : index
    %13 = vector.load %arg4[%c0_9, %c0_10, %c0_11] : memref<9x1x128xf32, #tpu.memory_space<vmem>>, vector<1x1x128xf32>
    %14 = vector.shape_cast %13 : vector<1x1x128xf32> to vector<1x128xf32>
    %15 = vector.broadcast %14 : vector<1x128xf32> to vector<128x128xf32>
    %16 = arith.mulf %12, %15 : vector<128x128xf32>
    %c8 = arith.constant 8 : index
    %c0_12 = arith.constant 0 : index
    %17 = vector.load %arg9[%c8, %c0_12] : memref<160x128xf32, #tpu.memory_space<vmem>>, vector<128x128xf32>
    %c1 = arith.constant 1 : index
    %c0_13 = arith.constant 0 : index
    %c0_14 = arith.constant 0 : index
    %18 = vector.load %arg5[%c1, %c0_13, %c0_14] : memref<9x128x1xf32, #tpu.memory_space<vmem>>, vector<1x128x1xf32>
    %19 = vector.shape_cast %18 : vector<1x128x1xf32> to vector<128x1xf32>
    %20 = vector.broadcast %19 : vector<128x1xf32> to vector<128x128xf32>
    %21 = arith.mulf %17, %20 : vector<128x128xf32>
    %c1_15 = arith.constant 1 : index
    %c0_16 = arith.constant 0 : index
    %c0_17 = arith.constant 0 : index
    %22 = vector.load %arg4[%c1_15, %c0_16, %c0_17] : memref<9x1x128xf32, #tpu.memory_space<vmem>>, vector<1x1x128xf32>
    %23 = vector.shape_cast %22 : vector<1x1x128xf32> to vector<1x128xf32>
    %24 = vector.broadcast %23 : vector<1x128xf32> to vector<128x128xf32>
    %25 = arith.mulf %21, %24 : vector<128x128xf32>
    %26 = arith.addf %16, %25 : vector<128x128xf32>
    %c9 = arith.constant 9 : index
    %c0_18 = arith.constant 0 : index
    %27 = vector.load %arg9[%c9, %c0_18] : memref<160x128xf32, #tpu.memory_space<vmem>>, vector<128x128xf32>
    %c2 = arith.constant 2 : index
    %c0_19 = arith.constant 0 : index
    %c0_20 = arith.constant 0 : index
    %28 = vector.load %arg5[%c2, %c0_19, %c0_20] : memref<9x128x1xf32, #tpu.memory_space<vmem>>, vector<1x128x1xf32>
    %29 = vector.shape_cast %28 : vector<1x128x1xf32> to vector<128x1xf32>
    %30 = vector.broadcast %29 : vector<128x1xf32> to vector<128x128xf32>
    %31 = arith.mulf %27, %30 : vector<128x128xf32>
    %c2_21 = arith.constant 2 : index
    %c0_22 = arith.constant 0 : index
    %c0_23 = arith.constant 0 : index
    %32 = vector.load %arg4[%c2_21, %c0_22, %c0_23] : memref<9x1x128xf32, #tpu.memory_space<vmem>>, vector<1x1x128xf32>
    %33 = vector.shape_cast %32 : vector<1x1x128xf32> to vector<1x128xf32>
    %34 = vector.broadcast %33 : vector<1x128xf32> to vector<128x128xf32>
    %35 = arith.mulf %31, %34 : vector<128x128xf32>
    %36 = arith.addf %26, %35 : vector<128x128xf32>
    %c15 = arith.constant 15 : index
    %c0_24 = arith.constant 0 : index
    %37 = vector.load %arg9[%c15, %c0_24] : memref<160x128xf32, #tpu.memory_space<vmem>>, vector<128x128xf32>
    %c3 = arith.constant 3 : index
    %c0_25 = arith.constant 0 : index
    %c0_26 = arith.constant 0 : index
    %38 = vector.load %arg5[%c3, %c0_25, %c0_26] : memref<9x128x1xf32, #tpu.memory_space<vmem>>, vector<1x128x1xf32>
    %39 = vector.shape_cast %38 : vector<1x128x1xf32> to vector<128x1xf32>
    %40 = vector.broadcast %39 : vector<128x1xf32> to vector<128x128xf32>
    %41 = arith.mulf %37, %40 : vector<128x128xf32>
    %c3_27 = arith.constant 3 : index
    %c0_28 = arith.constant 0 : index
    %c0_29 = arith.constant 0 : index
    %42 = vector.load %arg4[%c3_27, %c0_28, %c0_29] : memref<9x1x128xf32, #tpu.memory_space<vmem>>, vector<1x1x128xf32>
    %43 = vector.shape_cast %42 : vector<1x1x128xf32> to vector<1x128xf32>
    %44 = vector.broadcast %43 : vector<1x128xf32> to vector<128x128xf32>
    %45 = arith.mulf %41, %44 : vector<128x128xf32>
    %46 = arith.addf %36, %45 : vector<128x128xf32>
    %c16_30 = arith.constant 16 : index
    %c0_31 = arith.constant 0 : index
    %47 = vector.load %arg9[%c16_30, %c0_31] : memref<160x128xf32, #tpu.memory_space<vmem>>, vector<128x128xf32>
    %c4 = arith.constant 4 : index
    %c0_32 = arith.constant 0 : index
    %c0_33 = arith.constant 0 : index
    %48 = vector.load %arg5[%c4, %c0_32, %c0_33] : memref<9x128x1xf32, #tpu.memory_space<vmem>>, vector<1x128x1xf32>
    %49 = vector.shape_cast %48 : vector<1x128x1xf32> to vector<128x1xf32>
    %50 = vector.broadcast %49 : vector<128x1xf32> to vector<128x128xf32>
    %51 = arith.mulf %47, %50 : vector<128x128xf32>
    %c4_34 = arith.constant 4 : index
    %c0_35 = arith.constant 0 : index
    %c0_36 = arith.constant 0 : index
    %52 = vector.load %arg4[%c4_34, %c0_35, %c0_36] : memref<9x1x128xf32, #tpu.memory_space<vmem>>, vector<1x1x128xf32>
    %53 = vector.shape_cast %52 : vector<1x1x128xf32> to vector<1x128xf32>
    %54 = vector.broadcast %53 : vector<1x128xf32> to vector<128x128xf32>
    %55 = arith.mulf %51, %54 : vector<128x128xf32>
    %56 = arith.addf %46, %55 : vector<128x128xf32>
    %c17 = arith.constant 17 : index
    %c0_37 = arith.constant 0 : index
    %57 = vector.load %arg9[%c17, %c0_37] : memref<160x128xf32, #tpu.memory_space<vmem>>, vector<128x128xf32>
    %c5 = arith.constant 5 : index
    %c0_38 = arith.constant 0 : index
    %c0_39 = arith.constant 0 : index
    %58 = vector.load %arg5[%c5, %c0_38, %c0_39] : memref<9x128x1xf32, #tpu.memory_space<vmem>>, vector<1x128x1xf32>
    %59 = vector.shape_cast %58 : vector<1x128x1xf32> to vector<128x1xf32>
    %60 = vector.broadcast %59 : vector<128x1xf32> to vector<128x128xf32>
    %61 = arith.mulf %57, %60 : vector<128x128xf32>
    %c5_40 = arith.constant 5 : index
    %c0_41 = arith.constant 0 : index
    %c0_42 = arith.constant 0 : index
    %62 = vector.load %arg4[%c5_40, %c0_41, %c0_42] : memref<9x1x128xf32, #tpu.memory_space<vmem>>, vector<1x1x128xf32>
    %63 = vector.shape_cast %62 : vector<1x1x128xf32> to vector<1x128xf32>
    %64 = vector.broadcast %63 : vector<1x128xf32> to vector<128x128xf32>
    %65 = arith.mulf %61, %64 : vector<128x128xf32>
    %66 = arith.addf %56, %65 : vector<128x128xf32>
    %c23 = arith.constant 23 : index
    %c0_43 = arith.constant 0 : index
    %67 = vector.load %arg9[%c23, %c0_43] : memref<160x128xf32, #tpu.memory_space<vmem>>, vector<128x128xf32>
    %c6 = arith.constant 6 : index
    %c0_44 = arith.constant 0 : index
    %c0_45 = arith.constant 0 : index
    %68 = vector.load %arg5[%c6, %c0_44, %c0_45] : memref<9x128x1xf32, #tpu.memory_space<vmem>>, vector<1x128x1xf32>
    %69 = vector.shape_cast %68 : vector<1x128x1xf32> to vector<128x1xf32>
    %70 = vector.broadcast %69 : vector<128x1xf32> to vector<128x128xf32>
    %71 = arith.mulf %67, %70 : vector<128x128xf32>
    %c6_46 = arith.constant 6 : index
    %c0_47 = arith.constant 0 : index
    %c0_48 = arith.constant 0 : index
    %72 = vector.load %arg4[%c6_46, %c0_47, %c0_48] : memref<9x1x128xf32, #tpu.memory_space<vmem>>, vector<1x1x128xf32>
    %73 = vector.shape_cast %72 : vector<1x1x128xf32> to vector<1x128xf32>
    %74 = vector.broadcast %73 : vector<1x128xf32> to vector<128x128xf32>
    %75 = arith.mulf %71, %74 : vector<128x128xf32>
    %76 = arith.addf %66, %75 : vector<128x128xf32>
    %c24 = arith.constant 24 : index
    %c0_49 = arith.constant 0 : index
    %77 = vector.load %arg9[%c24, %c0_49] : memref<160x128xf32, #tpu.memory_space<vmem>>, vector<128x128xf32>
    %c7_50 = arith.constant 7 : index
    %c0_51 = arith.constant 0 : index
    %c0_52 = arith.constant 0 : index
    %78 = vector.load %arg5[%c7_50, %c0_51, %c0_52] : memref<9x128x1xf32, #tpu.memory_space<vmem>>, vector<1x128x1xf32>
    %79 = vector.shape_cast %78 : vector<1x128x1xf32> to vector<128x1xf32>
    %80 = vector.broadcast %79 : vector<128x1xf32> to vector<128x128xf32>
    %81 = arith.mulf %77, %80 : vector<128x128xf32>
    %c7_53 = arith.constant 7 : index
    %c0_54 = arith.constant 0 : index
    %c0_55 = arith.constant 0 : index
    %82 = vector.load %arg4[%c7_53, %c0_54, %c0_55] : memref<9x1x128xf32, #tpu.memory_space<vmem>>, vector<1x1x128xf32>
    %83 = vector.shape_cast %82 : vector<1x1x128xf32> to vector<1x128xf32>
    %84 = vector.broadcast %83 : vector<1x128xf32> to vector<128x128xf32>
    %85 = arith.mulf %81, %84 : vector<128x128xf32>
    %86 = arith.addf %76, %85 : vector<128x128xf32>
    %c25 = arith.constant 25 : index
    %c0_56 = arith.constant 0 : index
    %87 = vector.load %arg9[%c25, %c0_56] : memref<160x128xf32, #tpu.memory_space<vmem>>, vector<128x128xf32>
    %c8_57 = arith.constant 8 : index
    %c0_58 = arith.constant 0 : index
    %c0_59 = arith.constant 0 : index
    %88 = vector.load %arg5[%c8_57, %c0_58, %c0_59] : memref<9x128x1xf32, #tpu.memory_space<vmem>>, vector<1x128x1xf32>
    %89 = vector.shape_cast %88 : vector<1x128x1xf32> to vector<128x1xf32>
    %90 = vector.broadcast %89 : vector<128x1xf32> to vector<128x128xf32>
    %91 = arith.mulf %87, %90 : vector<128x128xf32>
    %c8_60 = arith.constant 8 : index
    %c0_61 = arith.constant 0 : index
    %c0_62 = arith.constant 0 : index
    %92 = vector.load %arg4[%c8_60, %c0_61, %c0_62] : memref<9x1x128xf32, #tpu.memory_space<vmem>>, vector<1x1x128xf32>
    %93 = vector.shape_cast %92 : vector<1x1x128xf32> to vector<1x128xf32>
    %94 = vector.broadcast %93 : vector<1x128xf32> to vector<128x128xf32>
    %95 = arith.mulf %91, %94 : vector<128x128xf32>
    %96 = arith.addf %86, %95 : vector<128x128xf32>
    %c0_63 = arith.constant 0 : index
    %c0_64 = arith.constant 0 : index
    %97 = vector.load %arg6[%c0_63, %c0_64] : memref<128x128xf32, #tpu.memory_space<vmem>>, vector<128x128xf32>
    %98 = arith.addf %96, %97 : vector<128x128xf32>
    %cst_65 = arith.constant 0.000000e+00 : f32
    %99 = vector.broadcast %cst_65 : f32 to vector<128x128xf32>
    %100 = arith.maximumf %98, %99 : vector<128x128xf32>
    %101 = arith.truncf %100 : vector<128x128xf32> to vector<128x128xbf16>
    %c0_66 = arith.constant 0 : index
    %c0_67 = arith.constant 0 : index
    %102 = vector.load %arg3[%c0_66, %c0_67] : memref<128x128xbf16, #tpu.memory_space<vmem>>, vector<128x128xbf16>
    %cst_68 = arith.constant dense<0.000000e+00> : vector<128x128xf32>
    %103 = tpu.matmul %101, %102, %cst_68 {dimension_numbers = #tpu.dot_dimension_numbers<[1], [0], [0], [1], [0, 0, 1, 1], [], []>} : vector<128x128xbf16>, vector<128x128xbf16>, vector<128x128xf32> -> vector<128x128xf32>
    %c0_69 = arith.constant 0 : index
    %c0_70 = arith.constant 0 : index
    %104 = vector.load %arg7[%c0_69, %c0_70] : memref<1x128xf32, #tpu.memory_space<vmem>>, vector<1x128xf32>
    %105 = vector.broadcast %104 : vector<1x128xf32> to vector<128x128xf32>
    %106 = arith.addf %103, %105 : vector<128x128xf32>
    %c0_71 = arith.constant 0 : index
    %c0_72 = arith.constant 0 : index
    %107 = vector.load %arg8[%c0_71, %c0_72] : memref<128x128xf32, #tpu.memory_space<vmem>>, vector<128x128xf32>
    tpu.vector_store %arg8[%c0_71, %c0_72], %106 {strides = array<i32>} : memref<128x128xf32, #tpu.memory_space<vmem>>, vector<128x128xf32>,
    return
  }
  func.func @transform_0(%arg0: i32) -> (i32, i32) {
    %c0_i32 = arith.constant 0 : i32
    %c0_i32_0 = arith.constant 0 : i32
    return %arg0, %c0_i32 : i32, i32
  }
  func.func @transform_1(%arg0: i32) -> (i32, i32) {
    %c0_i32 = arith.constant 0 : i32
    %c0_i32_0 = arith.constant 0 : i32
    %c0_i32_1 = arith.constant 0 : i32
    return %c0_i32, %c0_i32_0 : i32, i32
  }
  func.func @transform_2(%arg0: i32) -> (i32, i32) {
    %c0_i32 = arith.constant 0 : i32
    %c0_i32_0 = arith.constant 0 : i32
    %c0_i32_1 = arith.constant 0 : i32
    return %c0_i32, %c0_i32_0 : i32, i32
  }
  func.func @transform_3(%arg0: i32) -> (i32, i32, i32) {
    %c0_i32 = arith.constant 0 : i32
    %c0_i32_0 = arith.constant 0 : i32
    %c0_i32_1 = arith.constant 0 : i32
    %c0_i32_2 = arith.constant 0 : i32
    return %c0_i32, %c0_i32_0, %c0_i32_1 : i32, i32, i32
  }
  func.func @transform_4(%arg0: i32) -> (i32, i32, i32) {
    %c0_i32 = arith.constant 0 : i32
    %c0_i32_0 = arith.constant 0 : i32
    %c0_i32_1 = arith.constant 0 : i32
    %c0_i32_2 = arith.constant 0 : i32
    return %c0_i32, %c0_i32_0, %c0_i32_1 : i32, i32, i32
  }
  func.func @transform_5(%arg0: i32) -> (i32, i32) {
    %c0_i32 = arith.constant 0 : i32
    %c0_i32_0 = arith.constant 0 : i32
    %c0_i32_1 = arith.constant 0 : i32
    return %c0_i32, %c0_i32_0 : i32, i32
  }
  func.func @transform_6(%arg0: i32) -> (i32, i32) {
    %c0_i32 = arith.constant 0 : i32
    %c0_i32_0 = arith.constant 0 : i32
    %c0_i32_1 = arith.constant 0 : i32
    return %c0_i32, %c0_i32_0 : i32, i32
  }
  func.func @transform_7(%arg0: i32) -> (i32, i32) {
    %c0_i32 = arith.constant 0 : i32
    %c0_i32_0 = arith.constant 0 : i32
    return %arg0, %c0_i32 : i32, i32
  }
}

</mosaic_0001>

<llo_original>
// kernel: tpu_custom_call.1
$region0: #{tpu_custom_call.1}
  #allocation0 [shape = 'u32[]', space=smem, size = 0x4, offset = 0x4, fixed_abs, tag = 'smem constant byte address 0x4 - core index']
  #allocation1 [shape = 'u32[72,128]{1,0:T(1,128)}', space=vmem, size = 0x9000, scoped, tag = 'internal scratch']
  #allocation2 [shape = 'f32[160,128]{1,0:T(8,128)}', space=vmem, size = 0x14000, scoped, tag = 'scratch operand']
  %s0 = inlined_call_operand.vmem [shape: f32[128,128], index: 0, kind: input, shape index: {}]
  %s1 = inlined_call_operand.vmem [shape: bf16[128,128], index: 1, kind: input, shape index: {}]
  %s2 = inlined_call_operand.vmem [shape: bf16[128,128], index: 2, kind: input, shape index: {}]
  %s3 = inlined_call_operand.vmem [shape: f32[9,1,128], index: 3, kind: input, shape index: {}]
  %s4 = inlined_call_operand.vmem [shape: f32[9,128,1], index: 4, kind: input, shape index: {}]
  %s5 = inlined_call_operand.vmem [shape: f32[128,128], index: 5, kind: input, shape index: {}]
  %s6 = inlined_call_operand.vmem [shape: f32[1,128], index: 6, kind: input, shape index: {}]
  %s7 = inlined_call_operand.hbm [shape: f32[128,128], index: 7, kind: output, shape index: {}]
  %s8 = sld [smem:[#allocation0]]
  $region42: #{tpu_custom_call.1} parent=0
    _
  %s10 = ssub.s32 1, %s8
  %s11 = scalar_select 0, %s10, %s8
  $region1: #{tpu_custom_call.1} parent=0
    #allocation3 [shape = 'u8[65536]{0}', space=vmem, size = 0x10000, scoped, tag = 'output window, operand 0, single buffered']
    #allocation4 [shape = 's32[1]{0}', space=sflag, size = 0x4, scoped, tag = 'scoped memory for tpu_custom_call.1']
    %12 = vsyncpa [#allocation4], 0
    // Predicated region
    $region2: #{tpu_custom_call.1} parent=1 // pred_check
      _
    $region3: #{tpu_custom_call.1} parent=1 // pred_check_branch
      %14 = sbr.rel (0) target = $region5
    $region4: #{tpu_custom_call.1} parent=1 // pred_region
      _
    $region5: #{tpu_custom_call.1} parent=1 // pred_fallthru
      _
    // Predicated region
    $region6: #{tpu_custom_call.1} parent=1 // pred_check
      _
    $region7: #{tpu_custom_call.1} parent=1 // pred_check_branch
      %16 = sbr.rel (0) target = $region9
    $region8: #{tpu_custom_call.1} parent=1 // pred_region
      _
    $region9: #{tpu_custom_call.1} parent=1 // pred_fallthru
      _
    // Predicated region
    $region10: #{tpu_custom_call.1} parent=1 // pred_check
      _
    $region11: #{tpu_custom_call.1} parent=1 // pred_check_branch
      %18 = sbr.rel (0) target = $region13
    $region12: #{tpu_custom_call.1} parent=1 // pred_region
      _
    $region13: #{tpu_custom_call.1} parent=1 // pred_fallthru
      _
    // Predicated region
    $region14: #{tpu_custom_call.1} parent=1 // pred_check
      _
    $region15: #{tpu_custom_call.1} parent=1 // pred_check_branch
      %20 = sbr.rel (0) target = $region17
    $region16: #{tpu_custom_call.1} parent=1 // pred_region
      _
    $region17: #{tpu_custom_call.1} parent=1 // pred_fallthru
      _
    // Predicated region
    $region18: #{tpu_custom_call.1} parent=1 // pred_check
      _
    $region19: #{tpu_custom_call.1} parent=1 // pred_check_branch
      %22 = sbr.rel (0) target = $region21
    $region20: #{tpu_custom_call.1} parent=1 // pred_region
      _
    $region21: #{tpu_custom_call.1} parent=1 // pred_fallthru
      _
    // Predicated region
    $region22: #{tpu_custom_call.1} parent=1 // pred_check
      _
    $region23: #{tpu_custom_call.1} parent=1 // pred_check_branch
      %24 = sbr.rel (0) target = $region25
    $region24: #{tpu_custom_call.1} parent=1 // pred_region
      _
    $region25: #{tpu_custom_call.1} parent=1 // pred_fallthru
      _
    // Predicated region
    $region26: #{tpu_custom_call.1} parent=1 // pred_check
      _
    $region27: #{tpu_custom_call.1} parent=1 // pred_check_branch
      %26 = sbr.rel (0) target = $region29
    $region28: #{tpu_custom_call.1} parent=1 // pred_region
      _
    $region29: #{tpu_custom_call.1} parent=1 // pred_fallthru
      _
    %v27 = vld [vmem:[%s0] sm:$0xff]
    %v28 = vld [vmem:[%s0 + $0x8] sm:$0xff]
    %v29 = vld [vmem:[%s0 + $0x10] sm:$0xff]
    %v30 = vld [vmem:[%s0 + $0x18] sm:$0xff]
    %v31 = vld [vmem:[%s0 + $0x20] sm:$0xff]
    %v32 = vld [vmem:[%s0 + $0x28] sm:$0xff]
    %v33 = vld [vmem:[%s0 + $0x30] sm:$0xff]
    %v34 = vld [vmem:[%s0 + $0x38] sm:$0xff]
    %v35 = vld [vmem:[%s0 + $0x40] sm:$0xff]
    %v36 = vld [vmem:[%s0 + $0x48] sm:$0xff]
    %v37 = vld [vmem:[%s0 + $0x50] sm:$0xff]
    %v38 = vld [vmem:[%s0 + $0x58] sm:$0xff]
    %v39 = vld [vmem:[%s0 + $0x60] sm:$0xff]
    %v40 = vld [vmem:[%s0 + $0x68] sm:$0xff]
    %v41 = vld [vmem:[%s0 + $0x70] sm:$0xff]
    %v42 = vld [vmem:[%s0 + $0x78] sm:$0xff]
    %v43 = vpack.c.bf16 %v28, %v27
    %v44 = vpack.c.bf16 %v30, %v29
    %v45 = vpack.c.bf16 %v32, %v31
    %v46 = vpack.c.bf16 %v34, %v33
    %v47 = vpack.c.bf16 %v36, %v35
    %v48 = vpack.c.bf16 %v38, %v37
    %v49 = vpack.c.bf16 %v40, %v39
    %v50 = vpack.c.bf16 %v42, %v41
    %v51 = vld [vmem:[%s1] sm:$0xf]
    %v52 = vld [vmem:[%s1 + $0x4] sm:$0xf]
    %v53 = vld [vmem:[%s1 + $0x8] sm:$0xf]
    %v54 = vld [vmem:[%s1 + $0xc] sm:$0xf]
    %v55 = vld [vmem:[%s1 + $0x10] sm:$0xf]
    %v56 = vld [vmem:[%s1 + $0x14] sm:$0xf]
    %v57 = vld [vmem:[%s1 + $0x18] sm:$0xf]
    %v58 = vld [vmem:[%s1 + $0x1c] sm:$0xf]
    %v59 = vld [vmem:[%s1 + $0x20] sm:$0xf]
    %v60 = vld [vmem:[%s1 + $0x24] sm:$0xf]
    %v61 = vld [vmem:[%s1 + $0x28] sm:$0xf]
    %v62 = vld [vmem:[%s1 + $0x2c] sm:$0xf]
    %v63 = vld [vmem:[%s1 + $0x30] sm:$0xf]
    %v64 = vld [vmem:[%s1 + $0x34] sm:$0xf]
    %v65 = vld [vmem:[%s1 + $0x38] sm:$0xf]
    %v66 = vld [vmem:[%s1 + $0x3c] sm:$0xf]
    %v83 = vunpack.c.l.b16 %v51
    %v84 = vunpack.c.l.b16 %v52
    %v85 = vunpack.c.l.b16 %v53
    %v86 = vunpack.c.l.b16 %v54
    %v87 = vunpack.c.l.b16 %v55
    %v88 = vunpack.c.l.b16 %v56
    %v89 = vunpack.c.l.b16 %v57
    %v90 = vunpack.c.l.b16 %v58
    %v91 = vunpack.c.l.b16 %v59
    %v92 = vunpack.c.l.b16 %v60
    %v93 = vunpack.c.l.b16 %v61
    %v94 = vunpack.c.l.b16 %v62
    %v95 = vunpack.c.l.b16 %v63
    %v96 = vunpack.c.l.b16 %v64
    %v97 = vunpack.c.l.b16 %v65
    %v98 = vunpack.c.l.b16 %v66
    %v99 = vpack.c.b16 %v84, %v83
    %v100 = vpack.c.b16 %v86, %v85
    %v101 = vpack.c.b16 %v88, %v87
    %v102 = vpack.c.b16 %v90, %v89
    %v103 = vpack.c.b16 %v92, %v91
    %v104 = vpack.c.b16 %v94, %v93
    %v105 = vpack.c.b16 %v96, %v95
    %v106 = vpack.c.b16 %v98, %v97
    %115 = vmatpush.bf16.msra.mxu0 %v106
    %116 = vmatpush.bf16.msra.mxu0 %v105
    %117 = vmatpush.bf16.msra.mxu0 %v104
    %118 = vmatpush.bf16.msra.mxu0 %v103
    %119 = vmatpush.bf16.msra.mxu0 %v102
    %120 = vmatpush.bf16.msra.mxu0 %v101
    %121 = vmatpush.bf16.msra.mxu0 %v100
    %122 = vmatpush.bf16.msra.mxu0 %v99
    %123 = vmatmul.bf16.gmra.mxu0 %v43
    %v124 = vpop.f32.mrf.mxu0
    %v125 = vadd.f32 0.0, %v124
    %v126 = vpop.f32.mrf.mxu0
    %v127 = vadd.f32 0.0, %v126
    %128 = vmatmul.bf16.gmra.mxu0 %v44
    %v129 = vpop.f32.mrf.mxu0
    %v130 = vadd.f32 0.0, %v129
    %v131 = vpop.f32.mrf.mxu0
    %v132 = vadd.f32 0.0, %v131
    %133 = vmatmul.bf16.gmra.mxu0 %v45
    %v134 = vpop.f32.mrf.mxu0
    %v135 = vadd.f32 0.0, %v134
    %v136 = vpop.f32.mrf.mxu0
    %v137 = vadd.f32 0.0, %v136
    %138 = vmatmul.bf16.gmra.mxu0 %v46
    %v139 = vpop.f32.mrf.mxu0
    %v140 = vadd.f32 0.0, %v139
    %v141 = vpop.f32.mrf.mxu0
    %v142 = vadd.f32 0.0, %v141
    %143 = vmatmul.bf16.gmra.mxu0 %v47
    %v144 = vpop.f32.mrf.mxu0
    %v145 = vadd.f32 0.0, %v144
    %v146 = vpop.f32.mrf.mxu0
    %v147 = vadd.f32 0.0, %v146
    %148 = vmatmul.bf16.gmra.mxu0 %v48
    %v149 = vpop.f32.mrf.mxu0
    %v150 = vadd.f32 0.0, %v149
    %v151 = vpop.f32.mrf.mxu0
    %v152 = vadd.f32 0.0, %v151
    %153 = vmatmul.bf16.gmra.mxu0 %v49
    %v154 = vpop.f32.mrf.mxu0
    %v155 = vadd.f32 0.0, %v154
    %v156 = vpop.f32.mrf.mxu0
    %v157 = vadd.f32 0.0, %v156
    %158 = vmatmul.bf16.gmra.mxu0 %v50
    %v159 = vpop.f32.mrf.mxu0
    %v160 = vadd.f32 0.0, %v159
    %v161 = vpop.f32.mrf.mxu0
    %v162 = vadd.f32 0.0, %v161
    %163 = vdwg.mxu0
    %p164 = scmp.eq.s32.totalorder 0, 0
    // Predicated region
    $region30: #{tpu_custom_call.1} parent=1 // pred_check
      %p165 = pneg %p164
    $region31: #{tpu_custom_call.1} parent=1 // pred_check_branch
      %167 = sbr.rel (%p165) target = $region33
    $region32: #{tpu_custom_call.1} parent=1 // pred_region
      %168 = vst [vmem:[#allocation2] sm:$0xff] 0.0
      %169 = vst [vmem:[#allocation2 + $0x8] sm:$0xff] 0.0
      %170 = vst [vmem:[#allocation2 + $0x90] sm:$0xff] 0.0
      %171 = vst [vmem:[#allocation2 + $0x98] sm:$0xff] 0.0
    $region33: #{tpu_custom_call.1} parent=1 // pred_fallthru
      _
    %172 = vst [vmem:[#allocation2 + $0x10] sm:$0xff] %v125
    %173 = vst [vmem:[#allocation2 + $0x18] sm:$0xff] %v127
    %174 = vst [vmem:[#allocation2 + $0x20] sm:$0xff] %v130
    %175 = vst [vmem:[#allocation2 + $0x28] sm:$0xff] %v132
    %176 = vst [vmem:[#allocation2 + $0x30] sm:$0xff] %v135
    %177 = vst [vmem:[#allocation2 + $0x38] sm:$0xff] %v137
    %178 = vst [vmem:[#allocation2 + $0x40] sm:$0xff] %v140
    %179 = vst [vmem:[#allocation2 + $0x48] sm:$0xff] %v142
    %180 = vst [vmem:[#allocation2 + $0x50] sm:$0xff] %v145
    %181 = vst [vmem:[#allocation2 + $0x58] sm:$0xff] %v147
    %182 = vst [vmem:[#allocation2 + $0x60] sm:$0xff] %v150
    %183 = vst [vmem:[#allocation2 + $0x68] sm:$0xff] %v152
    %184 = vst [vmem:[#allocation2 + $0x70] sm:$0xff] %v155
    %185 = vst [vmem:[#allocation2 + $0x78] sm:$0xff] %v157
    %186 = vst [vmem:[#allocation2 + $0x80] sm:$0xff] %v160
    %187 = vst [vmem:[#allocation2 + $0x88] sm:$0xff] %v162
    %v188 = vld [vmem:[#allocation2 + $0x7] sm:$0xff]
    %v189 = vld [vmem:[#allocation2 + $0xf] sm:$0xff]
    %v190 = vld [vmem:[#allocation2 + $0x17] sm:$0xff]
    %v191 = vld [vmem:[#allocation2 + $0x1f] sm:$0xff]
    %v192 = vld [vmem:[#allocation2 + $0x27] sm:$0xff]
    %v193 = vld [vmem:[#allocation2 + $0x2f] sm:$0xff]
    %v194 = vld [vmem:[#allocation2 + $0x37] sm:$0xff]
    %v195 = vld [vmem:[#allocation2 + $0x3f] sm:$0xff]
    %v196 = vld [vmem:[#allocation2 + $0x47] sm:$0xff]
    %v197 = vld [vmem:[#allocation2 + $0x4f] sm:$0xff]
    %v198 = vld [vmem:[#allocation2 + $0x57] sm:$0xff]
    %v199 = vld [vmem:[#allocation2 + $0x5f] sm:$0xff]
    %v200 = vld [vmem:[#allocation2 + $0x67] sm:$0xff]
    %v201 = vld [vmem:[#allocation2 + $0x6f] sm:$0xff]
    %v202 = vld [vmem:[#allocation2 + $0x77] sm:$0xff]
    %v203 = vld [vmem:[#allocation2 + $0x7f] sm:$0xff]
    %v204 = vld [vmem:[%s4] sm:$0xff]
    %v205 = vld [vmem:[%s4 + $0x8] sm:$0xff]
    %v206 = vld [vmem:[%s4 + $0x10] sm:$0xff]
    %v207 = vld [vmem:[%s4 + $0x18] sm:$0xff]
    %v208 = vld [vmem:[%s4 + $0x20] sm:$0xff]
    %v209 = vld [vmem:[%s4 + $0x28] sm:$0xff]
    %v210 = vld [vmem:[%s4 + $0x30] sm:$0xff]
    %v211 = vld [vmem:[%s4 + $0x38] sm:$0xff]
    %v212 = vld [vmem:[%s4 + $0x40] sm:$0xff]
    %v213 = vld [vmem:[%s4 + $0x48] sm:$0xff]
    %v214 = vld [vmem:[%s4 + $0x50] sm:$0xff]
    %v215 = vld [vmem:[%s4 + $0x58] sm:$0xff]
    %v216 = vld [vmem:[%s4 + $0x60] sm:$0xff]
    %v217 = vld [vmem:[%s4 + $0x68] sm:$0xff]
    %v218 = vld [vmem:[%s4 + $0x70] sm:$0xff]
    %v219 = vld [vmem:[%s4 + $0x78] sm:$0xff]
    %221 = vset.pattern.permute.xlu0 0
    %222 = vperm.xlu0 %221, %v204
    %v223 = vpop.permute.xlu0 %222
    %226 = vset.pattern.permute.xlu0 0
    %227 = vperm.xlu0 %226, %v205
    %v228 = vpop.permute.xlu0 %227
    %231 = vset.pattern.permute.xlu0 0
    %232 = vperm.xlu0 %231, %v206
    %v233 = vpop.permute.xlu0 %232
    %236 = vset.pattern.permute.xlu0 0
    %237 = vperm.xlu0 %236, %v207
    %v238 = vpop.permute.xlu0 %237
    %241 = vset.pattern.permute.xlu0 0
    %242 = vperm.xlu0 %241, %v208
    %v243 = vpop.permute.xlu0 %242
    %246 = vset.pattern.permute.xlu0 0
    %247 = vperm.xlu0 %246, %v209
    %v248 = vpop.permute.xlu0 %247
    %251 = vset.pattern.permute.xlu0 0
    %252 = vperm.xlu0 %251, %v210
    %v253 = vpop.permute.xlu0 %252
    %256 = vset.pattern.permute.xlu0 0
    %257 = vperm.xlu0 %256, %v211
    %v258 = vpop.permute.xlu0 %257
    %261 = vset.pattern.permute.xlu0 0
    %262 = vperm.xlu0 %261, %v212
    %v263 = vpop.permute.xlu0 %262
    %266 = vset.pattern.permute.xlu0 0
    %267 = vperm.xlu0 %266, %v213
    %v268 = vpop.permute.xlu0 %267
    %271 = vset.pattern.permute.xlu0 0
    %272 = vperm.xlu0 %271, %v214
    %v273 = vpop.permute.xlu0 %272
    %276 = vset.pattern.permute.xlu0 0
    %277 = vperm.xlu0 %276, %v215
    %v278 = vpop.permute.xlu0 %277
    %281 = vset.pattern.permute.xlu0 0
    %282 = vperm.xlu0 %281, %v216
    %v283 = vpop.permute.xlu0 %282
    %286 = vset.pattern.permute.xlu0 0
    %287 = vperm.xlu0 %286, %v217
    %v288 = vpop.permute.xlu0 %287
    %291 = vset.pattern.permute.xlu0 0
    %292 = vperm.xlu0 %291, %v218
    %v293 = vpop.permute.xlu0 %292
    %296 = vset.pattern.permute.xlu0 0
    %297 = vperm.xlu0 %296, %v219
    %v298 = vpop.permute.xlu0 %297
    %v300 = vmul.f32 %v188, %v223
    %v301 = vmul.f32 %v189, %v228
    %v302 = vmul.f32 %v190, %v233
    %v303 = vmul.f32 %v191, %v238
    %v304 = vmul.f32 %v192, %v243
    %v305 = vmul.f32 %v193, %v248
    %v306 = vmul.f32 %v194, %v253
    %v307 = vmul.f32 %v195, %v258
    %v308 = vmul.f32 %v196, %v263
    %v309 = vmul.f32 %v197, %v268
    %v310 = vmul.f32 %v198, %v273
    %v311 = vmul.f32 %v199, %v278
    %v312 = vmul.f32 %v200, %v283
    %v313 = vmul.f32 %v201, %v288
    %v314 = vmul.f32 %v202, %v293
    %v315 = vmul.f32 %v203, %v298
    %v316 = vld [vmem:[%s3] sm:$0x1]
    %v318 = vperm.slane %v316, 0
    %v320 = vmul.f32 %v300, %v318
    %v321 = vmul.f32 %v301, %v318
    %v322 = vmul.f32 %v302, %v318
    %v323 = vmul.f32 %v303, %v318
    %v324 = vmul.f32 %v304, %v318
    %v325 = vmul.f32 %v305, %v318
    %v326 = vmul.f32 %v306, %v318
    %v327 = vmul.f32 %v307, %v318
    %v328 = vmul.f32 %v308, %v318
    %v329 = vmul.f32 %v309, %v318
    %v330 = vmul.f32 %v310, %v318
    %v331 = vmul.f32 %v311, %v318
    %v332 = vmul.f32 %v312, %v318
    %v333 = vmul.f32 %v313, %v318
    %v334 = vmul.f32 %v314, %v318
    %v335 = vmul.f32 %v315, %v318
    %v336 = vld [vmem:[#allocation2 + $0x8] sm:$0xff]
    %v337 = vld [vmem:[#allocation2 + $0x10] sm:$0xff]
    %v338 = vld [vmem:[#allocation2 + $0x18] sm:$0xff]
    %v339 = vld [vmem:[#allocation2 + $0x20] sm:$0xff]
    %v340 = vld [vmem:[#allocation2 + $0x28] sm:$0xff]
    %v341 = vld [vmem:[#allocation2 + $0x30] sm:$0xff]
    %v342 = vld [vmem:[#allocation2 + $0x38] sm:$0xff]
    %v343 = vld [vmem:[#allocation2 + $0x40] sm:$0xff]
    %v344 = vld [vmem:[#allocation2 + $0x48] sm:$0xff]
    %v345 = vld [vmem:[#allocation2 + $0x50] sm:$0xff]
    %v346 = vld [vmem:[#allocation2 + $0x58] sm:$0xff]
    %v347 = vld [vmem:[#allocation2 + $0x60] sm:$0xff]
    %v348 = vld [vmem:[#allocation2 + $0x68] sm:$0xff]
    %v349 = vld [vmem:[#allocation2 + $0x70] sm:$0xff]
    %v350 = vld [vmem:[#allocation2 + $0x78] sm:$0xff]
    %v351 = vld [vmem:[#allocation2 + $0x80] sm:$0xff]
    %s352 = scalar_lea.vmem %s4, 128
    %v353 = vld [vmem:[%s352] sm:$0xff]
    %v354 = vld [vmem:[%s352 + $0x8] sm:$0xff]
    %v355 = vld [vmem:[%s352 + $0x10] sm:$0xff]
    %v356 = vld [vmem:[%s352 + $0x18] sm:$0xff]
    %v357 = vld [vmem:[%s352 + $0x20] sm:$0xff]
    %v358 = vld [vmem:[%s352 + $0x28] sm:$0xff]
    %v359 = vld [vmem:[%s352 + $0x30] sm:$0xff]
    %v360 = vld [vmem:[%s352 + $0x38] sm:$0xff]
    %v361 = vld [vmem:[%s352 + $0x40] sm:$0xff]
    %v362 = vld [vmem:[%s352 + $0x48] sm:$0xff]
    %v363 = vld [vmem:[%s352 + $0x50] sm:$0xff]
    %v364 = vld [vmem:[%s352 + $0x58] sm:$0xff]
    %v365 = vld [vmem:[%s352 + $0x60] sm:$0xff]
    %v366 = vld [vmem:[%s352 + $0x68] sm:$0xff]
    %v367 = vld [vmem:[%s352 + $0x70] sm:$0xff]
    %v368 = vld [vmem:[%s352 + $0x78] sm:$0xff]
    %370 = vset.pattern.permute.xlu0 0
    %371 = vperm.xlu0 %370, %v353
    %v372 = vpop.permute.xlu0 %371
    %375 = vset.pattern.permute.xlu0 0
    %376 = vperm.xlu0 %375, %v354
    %v377 = vpop.permute.xlu0 %376
    %380 = vset.pattern.permute.xlu0 0
    %381 = vperm.xlu0 %380, %v355
    %v382 = vpop.permute.xlu0 %381
    %385 = vset.pattern.permute.xlu0 0
    %386 = vperm.xlu0 %385, %v356
    %v387 = vpop.permute.xlu0 %386
    %390 = vset.pattern.permute.xlu0 0
    %391 = vperm.xlu0 %390, %v357
    %v392 = vpop.permute.xlu0 %391
    %395 = vset.pattern.permute.xlu0 0
    %396 = vperm.xlu0 %395, %v358
    %v397 = vpop.permute.xlu0 %396
    %400 = vset.pattern.permute.xlu0 0
    %401 = vperm.xlu0 %400, %v359
    %v402 = vpop.permute.xlu0 %401
    %405 = vset.pattern.permute.xlu0 0
    %406 = vperm.xlu0 %405, %v360
    %v407 = vpop.permute.xlu0 %406
    %410 = vset.pattern.permute.xlu0 0
    %411 = vperm.xlu0 %410, %v361
    %v412 = vpop.permute.xlu0 %411
    %415 = vset.pattern.permute.xlu0 0
    %416 = vperm.xlu0 %415, %v362
    %v417 = vpop.permute.xlu0 %416
    %420 = vset.pattern.permute.xlu0 0
    %421 = vperm.xlu0 %420, %v363
    %v422 = vpop.permute.xlu0 %421
    %425 = vset.pattern.permute.xlu0 0
    %426 = vperm.xlu0 %425, %v364
    %v427 = vpop.permute.xlu0 %426
    %430 = vset.pattern.permute.xlu0 0
    %431 = vperm.xlu0 %430, %v365
    %v432 = vpop.permute.xlu0 %431
    %435 = vset.pattern.permute.xlu0 0
    %436 = vperm.xlu0 %435, %v366
    %v437 = vpop.permute.xlu0 %436
    %440 = vset.pattern.permute.xlu0 0
    %441 = vperm.xlu0 %440, %v367
    %v442 = vpop.permute.xlu0 %441
    %445 = vset.pattern.permute.xlu0 0
    %446 = vperm.xlu0 %445, %v368
    %v447 = vpop.permute.xlu0 %446
    %v449 = vmul.f32 %v336, %v372
    %v450 = vmul.f32 %v337, %v377
    %v451 = vmul.f32 %v338, %v382
    %v452 = vmul.f32 %v339, %v387
    %v453 = vmul.f32 %v340, %v392
    %v454 = vmul.f32 %v341, %v397
    %v455 = vmul.f32 %v342, %v402
    %v456 = vmul.f32 %v343, %v407
    %v457 = vmul.f32 %v344, %v412
    %v458 = vmul.f32 %v345, %v417
    %v459 = vmul.f32 %v346, %v422
    %v460 = vmul.f32 %v347, %v427
    %v461 = vmul.f32 %v348, %v432
    %v462 = vmul.f32 %v349, %v437
    %v463 = vmul.f32 %v350, %v442
    %v464 = vmul.f32 %v351, %v447
    %s465 = scalar_lea.vmem %s3, 1
    %v466 = vld [vmem:[%s465] sm:$0x1]
    %v468 = vperm.slane %v466, 0
    %v470 = vmul.f32 %v449, %v468
    %v471 = vmul.f32 %v450, %v468
    %v472 = vmul.f32 %v451, %v468
    %v473 = vmul.f32 %v452, %v468
    %v474 = vmul.f32 %v453, %v468
    %v475 = vmul.f32 %v454, %v468
    %v476 = vmul.f32 %v455, %v468
    %v477 = vmul.f32 %v456, %v468
    %v478 = vmul.f32 %v457, %v468
    %v479 = vmul.f32 %v458, %v468
    %v480 = vmul.f32 %v459, %v468
    %v481 = vmul.f32 %v460, %v468
    %v482 = vmul.f32 %v461, %v468
    %v483 = vmul.f32 %v462, %v468
    %v484 = vmul.f32 %v463, %v468
    %v485 = vmul.f32 %v464, %v468
    %v486 = vadd.f32 %v320, %v470
    %v487 = vadd.f32 %v321, %v471
    %v488 = vadd.f32 %v322, %v472
    %v489 = vadd.f32 %v323, %v473
    %v490 = vadd.f32 %v324, %v474
    %v491 = vadd.f32 %v325, %v475
    %v492 = vadd.f32 %v326, %v476
    %v493 = vadd.f32 %v327, %v477
    %v494 = vadd.f32 %v328, %v478
    %v495 = vadd.f32 %v329, %v479
    %v496 = vadd.f32 %v330, %v480
    %v497 = vadd.f32 %v331, %v481
    %v498 = vadd.f32 %v332, %v482
    %v499 = vadd.f32 %v333, %v483
    %v500 = vadd.f32 %v334, %v484
    %v501 = vadd.f32 %v335, %v485
    %v502 = vld [vmem:[#allocation2 + $0x9] sm:$0xff]
    %v503 = vld [vmem:[#allocation2 + $0x11] sm:$0xff]
    %v504 = vld [vmem:[#allocation2 + $0x19] sm:$0xff]
    %v505 = vld [vmem:[#allocation2 + $0x21] sm:$0xff]
    %v506 = vld [vmem:[#allocation2 + $0x29] sm:$0xff]
    %v507 = vld [vmem:[#allocation2 + $0x31] sm:$0xff]
    %v508 = vld [vmem:[#allocation2 + $0x39] sm:$0xff]
    %v509 = vld [vmem:[#allocation2 + $0x41] sm:$0xff]
    %v510 = vld [vmem:[#allocation2 + $0x49] sm:$0xff]
    %v511 = vld [vmem:[#allocation2 + $0x51] sm:$0xff]
    %v512 = vld [vmem:[#allocation2 + $0x59] sm:$0xff]
    %v513 = vld [vmem:[#allocation2 + $0x61] sm:$0xff]
    %v514 = vld [vmem:[#allocation2 + $0x69] sm:$0xff]
    %v515 = vld [vmem:[#allocation2 + $0x71] sm:$0xff]
    %v516 = vld [vmem:[#allocation2 + $0x79] sm:$0xff]
    %v517 = vld [vmem:[#allocation2 + $0x81] sm:$0xff]
    %s518 = scalar_lea.vmem %s4, 256
    %v519 = vld [vmem:[%s518] sm:$0xff]
    %v520 = vld [vmem:[%s518 + $0x8] sm:$0xff]
    %v521 = vld [vmem:[%s518 + $0x10] sm:$0xff]
    %v522 = vld [vmem:[%s518 + $0x18] sm:$0xff]
    %v523 = vld [vmem:[%s518 + $0x20] sm:$0xff]
    %v524 = vld [vmem:[%s518 + $0x28] sm:$0xff]
    %v525 = vld [vmem:[%s518 + $0x30] sm:$0xff]
    %v526 = vld [vmem:[%s518 + $0x38] sm:$0xff]
    %v527 = vld [vmem:[%s518 + $0x40] sm:$0xff]
    %v528 = vld [vmem:[%s518 + $0x48] sm:$0xff]
    %v529 = vld [vmem:[%s518 + $0x50] sm:$0xff]
    %v530 = vld [vmem:[%s518 + $0x58] sm:$0xff]
    %v531 = vld [vmem:[%s518 + $0x60] sm:$0xff]
    %v532 = vld [vmem:[%s518 + $0x68] sm:$0xff]
    %v533 = vld [vmem:[%s518 + $0x70] sm:$0xff]
    %v534 = vld [vmem:[%s518 + $0x78] sm:$0xff]
    %536 = vset.pattern.permute.xlu0 0
    %537 = vperm.xlu0 %536, %v519
    %v538 = vpop.permute.xlu0 %537
    %541 = vset.pattern.permute.xlu0 0
    %542 = vperm.xlu0 %541, %v520
    %v543 = vpop.permute.xlu0 %542
    %546 = vset.pattern.permute.xlu0 0
    %547 = vperm.xlu0 %546, %v521
    %v548 = vpop.permute.xlu0 %547
    %551 = vset.pattern.permute.xlu0 0
    %552 = vperm.xlu0 %551, %v522
    %v553 = vpop.permute.xlu0 %552
    %556 = vset.pattern.permute.xlu0 0
    %557 = vperm.xlu0 %556, %v523
    %v558 = vpop.permute.xlu0 %557
    %561 = vset.pattern.permute.xlu0 0
    %562 = vperm.xlu0 %561, %v524
    %v563 = vpop.permute.xlu0 %562
    %566 = vset.pattern.permute.xlu0 0
    %567 = vperm.xlu0 %566, %v525
    %v568 = vpop.permute.xlu0 %567
    %571 = vset.pattern.permute.xlu0 0
    %572 = vperm.xlu0 %571, %v526
    %v573 = vpop.permute.xlu0 %572
    %576 = vset.pattern.permute.xlu0 0
    %577 = vperm.xlu0 %576, %v527
    %v578 = vpop.permute.xlu0 %577
    %581 = vset.pattern.permute.xlu0 0
    %582 = vperm.xlu0 %581, %v528
    %v583 = vpop.permute.xlu0 %582
    %586 = vset.pattern.permute.xlu0 0
    %587 = vperm.xlu0 %586, %v529
    %v588 = vpop.permute.xlu0 %587
    %591 = vset.pattern.permute.xlu0 0
    %592 = vperm.xlu0 %591, %v530
    %v593 = vpop.permute.xlu0 %592
    %596 = vset.pattern.permute.xlu0 0
    %597 = vperm.xlu0 %596, %v531
    %v598 = vpop.permute.xlu0 %597
    %601 = vset.pattern.permute.xlu0 0
    %602 = vperm.xlu0 %601, %v532
    %v603 = vpop.permute.xlu0 %602
    %606 = vset.pattern.permute.xlu0 0
    %607 = vperm.xlu0 %606, %v533
    %v608 = vpop.permute.xlu0 %607
    %611 = vset.pattern.permute.xlu0 0
    %612 = vperm.xlu0 %611, %v534
    %v613 = vpop.permute.xlu0 %612
    %v615 = vmul.f32 %v502, %v538
    %v616 = vmul.f32 %v503, %v543
    %v617 = vmul.f32 %v504, %v548
    %v618 = vmul.f32 %v505, %v553
    %v619 = vmul.f32 %v506, %v558
    %v620 = vmul.f32 %v507, %v563
    %v621 = vmul.f32 %v508, %v568
    %v622 = vmul.f32 %v509, %v573
    %v623 = vmul.f32 %v510, %v578
    %v624 = vmul.f32 %v511, %v583
    %v625 = vmul.f32 %v512, %v588
    %v626 = vmul.f32 %v513, %v593
    %v627 = vmul.f32 %v514, %v598
    %v628 = vmul.f32 %v515, %v603
    %v629 = vmul.f32 %v516, %v608
    %v630 = vmul.f32 %v517, %v613
    %s631 = scalar_lea.vmem %s3, 2
    %v632 = vld [vmem:[%s631] sm:$0x1]
    %v634 = vperm.slane %v632, 0
    %v636 = vmul.f32 %v615, %v634
    %v637 = vmul.f32 %v616, %v634
    %v638 = vmul.f32 %v617, %v634
    %v639 = vmul.f32 %v618, %v634
    %v640 = vmul.f32 %v619, %v634
    %v641 = vmul.f32 %v620, %v634
    %v642 = vmul.f32 %v621, %v634
    %v643 = vmul.f32 %v622, %v634
    %v644 = vmul.f32 %v623, %v634
    %v645 = vmul.f32 %v624, %v634
    %v646 = vmul.f32 %v625, %v634
    %v647 = vmul.f32 %v626, %v634
    %v648 = vmul.f32 %v627, %v634
    %v649 = vmul.f32 %v628, %v634
    %v650 = vmul.f32 %v629, %v634
    %v651 = vmul.f32 %v630, %v634
    %v652 = vadd.f32 %v486, %v636
    %v653 = vadd.f32 %v487, %v637
    %v654 = vadd.f32 %v488, %v638
    %v655 = vadd.f32 %v489, %v639
    %v656 = vadd.f32 %v490, %v640
    %v657 = vadd.f32 %v491, %v641
    %v658 = vadd.f32 %v492, %v642
    %v659 = vadd.f32 %v493, %v643
    %v660 = vadd.f32 %v494, %v644
    %v661 = vadd.f32 %v495, %v645
    %v662 = vadd.f32 %v496, %v646
    %v663 = vadd.f32 %v497, %v647
    %v664 = vadd.f32 %v498, %v648
    %v665 = vadd.f32 %v499, %v649
    %v666 = vadd.f32 %v500, %v650
    %v667 = vadd.f32 %v501, %v651
    %v668 = vld [vmem:[#allocation2 + $0xf] sm:$0xff]
    %v669 = vld [vmem:[#allocation2 + $0x17] sm:$0xff]
    %v670 = vld [vmem:[#allocation2 + $0x1f] sm:$0xff]
    %v671 = vld [vmem:[#allocation2 + $0x27] sm:$0xff]
    %v672 = vld [vmem:[#allocation2 + $0x2f] sm:$0xff]
    %v673 = vld [vmem:[#allocation2 + $0x37] sm:$0xff]
    %v674 = vld [vmem:[#allocation2 + $0x3f] sm:$0xff]
    %v675 = vld [vmem:[#allocation2 + $0x47] sm:$0xff]
    %v676 = vld [vmem:[#allocation2 + $0x4f] sm:$0xff]
    %v677 = vld [vmem:[#allocation2 + $0x57] sm:$0xff]
    %v678 = vld [vmem:[#allocation2 + $0x5f] sm:$0xff]
    %v679 = vld [vmem:[#allocation2 + $0x67] sm:$0xff]
    %v680 = vld [vmem:[#allocation2 + $0x6f] sm:$0xff]
    %v681 = vld [vmem:[#allocation2 + $0x77] sm:$0xff]
    %v682 = vld [vmem:[#allocation2 + $0x7f] sm:$0xff]
    %v683 = vld [vmem:[#allocation2 + $0x87] sm:$0xff]
    %s684 = scalar_lea.vmem %s4, 384
    %v685 = vld [vmem:[%s684] sm:$0xff]
    %v686 = vld [vmem:[%s684 + $0x8] sm:$0xff]
    %v687 = vld [vmem:[%s684 + $0x10] sm:$0xff]
    %v688 = vld [vmem:[%s684 + $0x18] sm:$0xff]
    %v689 = vld [vmem:[%s684 + $0x20] sm:$0xff]
    %v690 = vld [vmem:[%s684 + $0x28] sm:$0xff]
    %v691 = vld [vmem:[%s684 + $0x30] sm:$0xff]
    %v692 = vld [vmem:[%s684 + $0x38] sm:$0xff]
    %v693 = vld [vmem:[%s684 + $0x40] sm:$0xff]
    %v694 = vld [vmem:[%s684 + $0x48] sm:$0xff]
    %v695 = vld [vmem:[%s684 + $0x50] sm:$0xff]
    %v696 = vld [vmem:[%s684 + $0x58] sm:$0xff]
    %v697 = vld [vmem:[%s684 + $0x60] sm:$0xff]
    %v698 = vld [vmem:[%s684 + $0x68] sm:$0xff]
    %v699 = vld [vmem:[%s684 + $0x70] sm:$0xff]
    %v700 = vld [vmem:[%s684 + $0x78] sm:$0xff]
    %702 = vset.pattern.permute.xlu0 0
    %703 = vperm.xlu0 %702, %v685
    %v704 = vpop.permute.xlu0 %703
    %707 = vset.pattern.permute.xlu0 0
    %708 = vperm.xlu0 %707, %v686
    %v709 = vpop.permute.xlu0 %708
    %712 = vset.pattern.permute.xlu0 0
    %713 = vperm.xlu0 %712, %v687
    %v714 = vpop.permute.xlu0 %713
    %717 = vset.pattern.permute.xlu0 0
    %718 = vperm.xlu0 %717, %v688
    %v719 = vpop.permute.xlu0 %718
    %722 = vset.pattern.permute.xlu0 0
    %723 = vperm.xlu0 %722, %v689
    %v724 = vpop.permute.xlu0 %723
    %727 = vset.pattern.permute.xlu0 0
    %728 = vperm.xlu0 %727, %v690
    %v729 = vpop.permute.xlu0 %728
    %732 = vset.pattern.permute.xlu0 0
    %733 = vperm.xlu0 %732, %v691
    %v734 = vpop.permute.xlu0 %733
    %737 = vset.pattern.permute.xlu0 0
    %738 = vperm.xlu0 %737, %v692
    %v739 = vpop.permute.xlu0 %738
    %742 = vset.pattern.permute.xlu0 0
    %743 = vperm.xlu0 %742, %v693
    %v744 = vpop.permute.xlu0 %743
    %747 = vset.pattern.permute.xlu0 0
    %748 = vperm.xlu0 %747, %v694
    %v749 = vpop.permute.xlu0 %748
    %752 = vset.pattern.permute.xlu0 0
    %753 = vperm.xlu0 %752, %v695
    %v754 = vpop.permute.xlu0 %753
    %757 = vset.pattern.permute.xlu0 0
    %758 = vperm.xlu0 %757, %v696
    %v759 = vpop.permute.xlu0 %758
    %762 = vset.pattern.permute.xlu0 0
    %763 = vperm.xlu0 %762, %v697
    %v764 = vpop.permute.xlu0 %763
    %767 = vset.pattern.permute.xlu0 0
    %768 = vperm.xlu0 %767, %v698
    %v769 = vpop.permute.xlu0 %768
    %772 = vset.pattern.permute.xlu0 0
    %773 = vperm.xlu0 %772, %v699
    %v774 = vpop.permute.xlu0 %773
    %777 = vset.pattern.permute.xlu0 0
    %778 = vperm.xlu0 %777, %v700
    %v779 = vpop.permute.xlu0 %778
    %v781 = vmul.f32 %v668, %v704
    %v782 = vmul.f32 %v669, %v709
    %v783 = vmul.f32 %v670, %v714
    %v784 = vmul.f32 %v671, %v719
    %v785 = vmul.f32 %v672, %v724
    %v786 = vmul.f32 %v673, %v729
    %v787 = vmul.f32 %v674, %v734
    %v788 = vmul.f32 %v675, %v739
    %v789 = vmul.f32 %v676, %v744
    %v790 = vmul.f32 %v677, %v749
    %v791 = vmul.f32 %v678, %v754
    %v792 = vmul.f32 %v679, %v759
    %v793 = vmul.f32 %v680, %v764
    %v794 = vmul.f32 %v681, %v769
    %v795 = vmul.f32 %v682, %v774
    %v796 = vmul.f32 %v683, %v779
    %s797 = scalar_lea.vmem %s3, 3
    %v798 = vld [vmem:[%s797] sm:$0x1]
    %v800 = vperm.slane %v798, 0
    %v802 = vmul.f32 %v781, %v800
    %v803 = vmul.f32 %v782, %v800
    %v804 = vmul.f32 %v783, %v800
    %v805 = vmul.f32 %v784, %v800
    %v806 = vmul.f32 %v785, %v800
    %v807 = vmul.f32 %v786, %v800
    %v808 = vmul.f32 %v787, %v800
    %v809 = vmul.f32 %v788, %v800
    %v810 = vmul.f32 %v789, %v800
    %v811 = vmul.f32 %v790, %v800
    %v812 = vmul.f32 %v791, %v800
    %v813 = vmul.f32 %v792, %v800
    %v814 = vmul.f32 %v793, %v800
    %v815 = vmul.f32 %v794, %v800
    %v816 = vmul.f32 %v795, %v800
    %v817 = vmul.f32 %v796, %v800
    %v818 = vadd.f32 %v652, %v802
    %v819 = vadd.f32 %v653, %v803
    %v820 = vadd.f32 %v654, %v804
    %v821 = vadd.f32 %v655, %v805
    %v822 = vadd.f32 %v656, %v806
    %v823 = vadd.f32 %v657, %v807
    %v824 = vadd.f32 %v658, %v808
    %v825 = vadd.f32 %v659, %v809
    %v826 = vadd.f32 %v660, %v810
    %v827 = vadd.f32 %v661, %v811
    %v828 = vadd.f32 %v662, %v812
    %v829 = vadd.f32 %v663, %v813
    %v830 = vadd.f32 %v664, %v814
    %v831 = vadd.f32 %v665, %v815
    %v832 = vadd.f32 %v666, %v816
    %v833 = vadd.f32 %v667, %v817
    %v834 = vld [vmem:[#allocation2 + $0x10] sm:$0xff]
    %v835 = vld [vmem:[#allocation2 + $0x18] sm:$0xff]
    %v836 = vld [vmem:[#allocation2 + $0x20] sm:$0xff]
    %v837 = vld [vmem:[#allocation2 + $0x28] sm:$0xff]
    %v838 = vld [vmem:[#allocation2 + $0x30] sm:$0xff]
    %v839 = vld [vmem:[#allocation2 + $0x38] sm:$0xff]
    %v840 = vld [vmem:[#allocation2 + $0x40] sm:$0xff]
    %v841 = vld [vmem:[#allocation2 + $0x48] sm:$0xff]
    %v842 = vld [vmem:[#allocation2 + $0x50] sm:$0xff]
    %v843 = vld [vmem:[#allocation2 + $0x58] sm:$0xff]
    %v844 = vld [vmem:[#allocation2 + $0x60] sm:$0xff]
    %v845 = vld [vmem:[#allocation2 + $0x68] sm:$0xff]
    %v846 = vld [vmem:[#allocation2 + $0x70] sm:$0xff]
    %v847 = vld [vmem:[#allocation2 + $0x78] sm:$0xff]
    %v848 = vld [vmem:[#allocation2 + $0x80] sm:$0xff]
    %v849 = vld [vmem:[#allocation2 + $0x88] sm:$0xff]
    %s850 = scalar_lea.vmem %s4, 512
    %v851 = vld [vmem:[%s850] sm:$0xff]
    %v852 = vld [vmem:[%s850 + $0x8] sm:$0xff]
    %v853 = vld [vmem:[%s850 + $0x10] sm:$0xff]
    %v854 = vld [vmem:[%s850 + $0x18] sm:$0xff]
    %v855 = vld [vmem:[%s850 + $0x20] sm:$0xff]
    %v856 = vld [vmem:[%s850 + $0x28] sm:$0xff]
    %v857 = vld [vmem:[%s850 + $0x30] sm:$0xff]
    %v858 = vld [vmem:[%s850 + $0x38] sm:$0xff]
    %v859 = vld [vmem:[%s850 + $0x40] sm:$0xff]
    %v860 = vld [vmem:[%s850 + $0x48] sm:$0xff]
    %v861 = vld [vmem:[%s850 + $0x50] sm:$0xff]
    %v862 = vld [vmem:[%s850 + $0x58] sm:$0xff]
    %v863 = vld [vmem:[%s850 + $0x60] sm:$0xff]
    %v864 = vld [vmem:[%s850 + $0x68] sm:$0xff]
    %v865 = vld [vmem:[%s850 + $0x70] sm:$0xff]
    %v866 = vld [vmem:[%s850 + $0x78] sm:$0xff]
    %868 = vset.pattern.permute.xlu0 0
    %869 = vperm.xlu0 %868, %v851
    %v870 = vpop.permute.xlu0 %869
    %873 = vset.pattern.permute.xlu0 0
    %874 = vperm.xlu0 %873, %v852
    %v875 = vpop.permute.xlu0 %874
    %878 = vset.pattern.permute.xlu0 0
    %879 = vperm.xlu0 %878, %v853
    %v880 = vpop.permute.xlu0 %879
    %883 = vset.pattern.permute.xlu0 0
    %884 = vperm.xlu0 %883, %v854
    %v885 = vpop.permute.xlu0 %884
    %888 = vset.pattern.permute.xlu0 0
    %889 = vperm.xlu0 %888, %v855
    %v890 = vpop.permute.xlu0 %889
    %893 = vset.pattern.permute.xlu0 0
    %894 = vperm.xlu0 %893, %v856
    %v895 = vpop.permute.xlu0 %894
    %898 = vset.pattern.permute.xlu0 0
    %899 = vperm.xlu0 %898, %v857
    %v900 = vpop.permute.xlu0 %899
    %903 = vset.pattern.permute.xlu0 0
    %904 = vperm.xlu0 %903, %v858
    %v905 = vpop.permute.xlu0 %904
    %908 = vset.pattern.permute.xlu0 0
    %909 = vperm.xlu0 %908, %v859
    %v910 = vpop.permute.xlu0 %909
    %913 = vset.pattern.permute.xlu0 0
    %914 = vperm.xlu0 %913, %v860
    %v915 = vpop.permute.xlu0 %914
    %918 = vset.pattern.permute.xlu0 0
    %919 = vperm.xlu0 %918, %v861
    %v920 = vpop.permute.xlu0 %919
    %923 = vset.pattern.permute.xlu0 0
    %924 = vperm.xlu0 %923, %v862
    %v925 = vpop.permute.xlu0 %924
    %928 = vset.pattern.permute.xlu0 0
    %929 = vperm.xlu0 %928, %v863
    %v930 = vpop.permute.xlu0 %929
    %933 = vset.pattern.permute.xlu0 0
    %934 = vperm.xlu0 %933, %v864
    %v935 = vpop.permute.xlu0 %934
    %938 = vset.pattern.permute.xlu0 0
    %939 = vperm.xlu0 %938, %v865
    %v940 = vpop.permute.xlu0 %939
    %943 = vset.pattern.permute.xlu0 0
    %944 = vperm.xlu0 %943, %v866
    %v945 = vpop.permute.xlu0 %944
    %v947 = vmul.f32 %v834, %v870
    %v948 = vmul.f32 %v835, %v875
    %v949 = vmul.f32 %v836, %v880
    %v950 = vmul.f32 %v837, %v885
    %v951 = vmul.f32 %v838, %v890
    %v952 = vmul.f32 %v839, %v895
    %v953 = vmul.f32 %v840, %v900
    %v954 = vmul.f32 %v841, %v905
    %v955 = vmul.f32 %v842, %v910
    %v956 = vmul.f32 %v843, %v915
    %v957 = vmul.f32 %v844, %v920
    %v958 = vmul.f32 %v845, %v925
    %v959 = vmul.f32 %v846, %v930
    %v960 = vmul.f32 %v847, %v935
    %v961 = vmul.f32 %v848, %v940
    %v962 = vmul.f32 %v849, %v945
    %s963 = scalar_lea.vmem %s3, 4
    %v964 = vld [vmem:[%s963] sm:$0x1]
    %v966 = vperm.slane %v964, 0
    %v968 = vmul.f32 %v947, %v966
    %v969 = vmul.f32 %v948, %v966
    %v970 = vmul.f32 %v949, %v966
    %v971 = vmul.f32 %v950, %v966
    %v972 = vmul.f32 %v951, %v966
    %v973 = vmul.f32 %v952, %v966
    %v974 = vmul.f32 %v953, %v966
    %v975 = vmul.f32 %v954, %v966
    %v976 = vmul.f32 %v955, %v966
    %v977 = vmul.f32 %v956, %v966
    %v978 = vmul.f32 %v957, %v966
    %v979 = vmul.f32 %v958, %v966
    %v980 = vmul.f32 %v959, %v966
    %v981 = vmul.f32 %v960, %v966
    %v982 = vmul.f32 %v961, %v966
    %v983 = vmul.f32 %v962, %v966
    %v984 = vadd.f32 %v818, %v968
    %v985 = vadd.f32 %v819, %v969
    %v986 = vadd.f32 %v820, %v970
    %v987 = vadd.f32 %v821, %v971
    %v988 = vadd.f32 %v822, %v972
    %v989 = vadd.f32 %v823, %v973
    %v990 = vadd.f32 %v824, %v974
    %v991 = vadd.f32 %v825, %v975
    %v992 = vadd.f32 %v826, %v976
    %v993 = vadd.f32 %v827, %v977
    %v994 = vadd.f32 %v828, %v978
    %v995 = vadd.f32 %v829, %v979
    %v996 = vadd.f32 %v830, %v980
    %v997 = vadd.f32 %v831, %v981
    %v998 = vadd.f32 %v832, %v982
    %v999 = vadd.f32 %v833, %v983
    %v1000 = vld [vmem:[#allocation2 + $0x11] sm:$0xff]
    %v1001 = vld [vmem:[#allocation2 + $0x19] sm:$0xff]
    %v1002 = vld [vmem:[#allocation2 + $0x21] sm:$0xff]
    %v1003 = vld [vmem:[#allocation2 + $0x29] sm:$0xff]
    %v1004 = vld [vmem:[#allocation2 + $0x31] sm:$0xff]
    %v1005 = vld [vmem:[#allocation2 + $0x39] sm:$0xff]
    %v1006 = vld [vmem:[#allocation2 + $0x41] sm:$0xff]
    %v1007 = vld [vmem:[#allocation2 + $0x49] sm:$0xff]
    %v1008 = vld [vmem:[#allocation2 + $0x51] sm:$0xff]
    %v1009 = vld [vmem:[#allocation2 + $0x59] sm:$0xff]
    %v1010 = vld [vmem:[#allocation2 + $0x61] sm:$0xff]
    %v1011 = vld [vmem:[#allocation2 + $0x69] sm:$0xff]
    %v1012 = vld [vmem:[#allocation2 + $0x71] sm:$0xff]
    %v1013 = vld [vmem:[#allocation2 + $0x79] sm:$0xff]
    %v1014 = vld [vmem:[#allocation2 + $0x81] sm:$0xff]
    %v1015 = vld [vmem:[#allocation2 + $0x89] sm:$0xff]
    %s1016 = scalar_lea.vmem %s4, 640
    %v1017 = vld [vmem:[%s1016] sm:$0xff]
    %v1018 = vld [vmem:[%s1016 + $0x8] sm:$0xff]
    %v1019 = vld [vmem:[%s1016 + $0x10] sm:$0xff]
    %v1020 = vld [vmem:[%s1016 + $0x18] sm:$0xff]
    %v1021 = vld [vmem:[%s1016 + $0x20] sm:$0xff]
    %v1022 = vld [vmem:[%s1016 + $0x28] sm:$0xff]
    %v1023 = vld [vmem:[%s1016 + $0x30] sm:$0xff]
    %v1024 = vld [vmem:[%s1016 + $0x38] sm:$0xff]
    %v1025 = vld [vmem:[%s1016 + $0x40] sm:$0xff]
    %v1026 = vld [vmem:[%s1016 + $0x48] sm:$0xff]
    %v1027 = vld [vmem:[%s1016 + $0x50] sm:$0xff]
    %v1028 = vld [vmem:[%s1016 + $0x58] sm:$0xff]
    %v1029 = vld [vmem:[%s1016 + $0x60] sm:$0xff]
    %v1030 = vld [vmem:[%s1016 + $0x68] sm:$0xff]
    %v1031 = vld [vmem:[%s1016 + $0x70] sm:$0xff]
    %v1032 = vld [vmem:[%s1016 + $0x78] sm:$0xff]
    %1034 = vset.pattern.permute.xlu0 0
    %1035 = vperm.xlu0 %1034, %v1017
    %v1036 = vpop.permute.xlu0 %1035
    %1039 = vset.pattern.permute.xlu0 0
    %1040 = vperm.xlu0 %1039, %v1018
    %v1041 = vpop.permute.xlu0 %1040
    %1044 = vset.pattern.permute.xlu0 0
    %1045 = vperm.xlu0 %1044, %v1019
    %v1046 = vpop.permute.xlu0 %1045
    %1049 = vset.pattern.permute.xlu0 0
    %1050 = vperm.xlu0 %1049, %v1020
    %v1051 = vpop.permute.xlu0 %1050
    %1054 = vset.pattern.permute.xlu0 0
    %1055 = vperm.xlu0 %1054, %v1021
    %v1056 = vpop.permute.xlu0 %1055
    %1059 = vset.pattern.permute.xlu0 0
    %1060 = vperm.xlu0 %1059, %v1022
    %v1061 = vpop.permute.xlu0 %1060
    %1064 = vset.pattern.permute.xlu0 0
    %1065 = vperm.xlu0 %1064, %v1023
    %v1066 = vpop.permute.xlu0 %1065
    %1069 = vset.pattern.permute.xlu0 0
    %1070 = vperm.xlu0 %1069, %v1024
    %v1071 = vpop.permute.xlu0 %1070
    %1074 = vset.pattern.permute.xlu0 0
    %1075 = vperm.xlu0 %1074, %v1025
    %v1076 = vpop.permute.xlu0 %1075
    %1079 = vset.pattern.permute.xlu0 0
    %1080 = vperm.xlu0 %1079, %v1026
    %v1081 = vpop.permute.xlu0 %1080
    %1084 = vset.pattern.permute.xlu0 0
    %1085 = vperm.xlu0 %1084, %v1027
    %v1086 = vpop.permute.xlu0 %1085
    %1089 = vset.pattern.permute.xlu0 0
    %1090 = vperm.xlu0 %1089, %v1028
    %v1091 = vpop.permute.xlu0 %1090
    %1094 = vset.pattern.permute.xlu0 0
    %1095 = vperm.xlu0 %1094, %v1029
    %v1096 = vpop.permute.xlu0 %1095
    %1099 = vset.pattern.permute.xlu0 0
    %1100 = vperm.xlu0 %1099, %v1030
    %v1101 = vpop.permute.xlu0 %1100
    %1104 = vset.pattern.permute.xlu0 0
    %1105 = vperm.xlu0 %1104, %v1031
    %v1106 = vpop.permute.xlu0 %1105
    %1109 = vset.pattern.permute.xlu0 0
    %1110 = vperm.xlu0 %1109, %v1032
    %v1111 = vpop.permute.xlu0 %1110
    %v1113 = vmul.f32 %v1000, %v1036
    %v1114 = vmul.f32 %v1001, %v1041
    %v1115 = vmul.f32 %v1002, %v1046
    %v1116 = vmul.f32 %v1003, %v1051
    %v1117 = vmul.f32 %v1004, %v1056
    %v1118 = vmul.f32 %v1005, %v1061
    %v1119 = vmul.f32 %v1006, %v1066
    %v1120 = vmul.f32 %v1007, %v1071
    %v1121 = vmul.f32 %v1008, %v1076
    %v1122 = vmul.f32 %v1009, %v1081
    %v1123 = vmul.f32 %v1010, %v1086
    %v1124 = vmul.f32 %v1011, %v1091
    %v1125 = vmul.f32 %v1012, %v1096
    %v1126 = vmul.f32 %v1013, %v1101
    %v1127 = vmul.f32 %v1014, %v1106
    %v1128 = vmul.f32 %v1015, %v1111
    %s1129 = scalar_lea.vmem %s3, 5
    %v1130 = vld [vmem:[%s1129] sm:$0x1]
    %v1132 = vperm.slane %v1130, 0
    %v1134 = vmul.f32 %v1113, %v1132
    %v1135 = vmul.f32 %v1114, %v1132
    %v1136 = vmul.f32 %v1115, %v1132
    %v1137 = vmul.f32 %v1116, %v1132
    %v1138 = vmul.f32 %v1117, %v1132
    %v1139 = vmul.f32 %v1118, %v1132
    %v1140 = vmul.f32 %v1119, %v1132
    %v1141 = vmul.f32 %v1120, %v1132
    %v1142 = vmul.f32 %v1121, %v1132
    %v1143 = vmul.f32 %v1122, %v1132
    %v1144 = vmul.f32 %v1123, %v1132
    %v1145 = vmul.f32 %v1124, %v1132
    %v1146 = vmul.f32 %v1125, %v1132
    %v1147 = vmul.f32 %v1126, %v1132
    %v1148 = vmul.f32 %v1127, %v1132
    %v1149 = vmul.f32 %v1128, %v1132
    %v1150 = vadd.f32 %v984, %v1134
    %v1151 = vadd.f32 %v985, %v1135
    %v1152 = vadd.f32 %v986, %v1136
    %v1153 = vadd.f32 %v987, %v1137
    %v1154 = vadd.f32 %v988, %v1138
    %v1155 = vadd.f32 %v989, %v1139
    %v1156 = vadd.f32 %v990, %v1140
    %v1157 = vadd.f32 %v991, %v1141
    %v1158 = vadd.f32 %v992, %v1142
    %v1159 = vadd.f32 %v993, %v1143
    %v1160 = vadd.f32 %v994, %v1144
    %v1161 = vadd.f32 %v995, %v1145
    %v1162 = vadd.f32 %v996, %v1146
    %v1163 = vadd.f32 %v997, %v1147
    %v1164 = vadd.f32 %v998, %v1148
    %v1165 = vadd.f32 %v999, %v1149
    %v1166 = vld [vmem:[#allocation2 + $0x17] sm:$0xff]
    %v1167 = vld [vmem:[#allocation2 + $0x1f] sm:$0xff]
    %v1168 = vld [vmem:[#allocation2 + $0x27] sm:$0xff]
    %v1169 = vld [vmem:[#allocation2 + $0x2f] sm:$0xff]
    %v1170 = vld [vmem:[#allocation2 + $0x37] sm:$0xff]
    %v1171 = vld [vmem:[#allocation2 + $0x3f] sm:$0xff]
    %v1172 = vld [vmem:[#allocation2 + $0x47] sm:$0xff]
    %v1173 = vld [vmem:[#allocation2 + $0x4f] sm:$0xff]
    %v1174 = vld [vmem:[#allocation2 + $0x57] sm:$0xff]
    %v1175 = vld [vmem:[#allocation2 + $0x5f] sm:$0xff]
    %v1176 = vld [vmem:[#allocation2 + $0x67] sm:$0xff]
    %v1177 = vld [vmem:[#allocation2 + $0x6f] sm:$0xff]
    %v1178 = vld [vmem:[#allocation2 + $0x77] sm:$0xff]
    %v1179 = vld [vmem:[#allocation2 + $0x7f] sm:$0xff]
    %v1180 = vld [vmem:[#allocation2 + $0x87] sm:$0xff]
    %v1181 = vld [vmem:[#allocation2 + $0x8f] sm:$0xff]
    %s1182 = scalar_lea.vmem %s4, 768
    %v1183 = vld [vmem:[%s1182] sm:$0xff]
    %v1184 = vld [vmem:[%s1182 + $0x8] sm:$0xff]
    %v1185 = vld [vmem:[%s1182 + $0x10] sm:$0xff]
    %v1186 = vld [vmem:[%s1182 + $0x18] sm:$0xff]
    %v1187 = vld [vmem:[%s1182 + $0x20] sm:$0xff]
    %v1188 = vld [vmem:[%s1182 + $0x28] sm:$0xff]
    %v1189 = vld [vmem:[%s1182 + $0x30] sm:$0xff]
    %v1190 = vld [vmem:[%s1182 + $0x38] sm:$0xff]
    %v1191 = vld [vmem:[%s1182 + $0x40] sm:$0xff]
    %v1192 = vld [vmem:[%s1182 + $0x48] sm:$0xff]
    %v1193 = vld [vmem:[%s1182 + $0x50] sm:$0xff]
    %v1194 = vld [vmem:[%s1182 + $0x58] sm:$0xff]
    %v1195 = vld [vmem:[%s1182 + $0x60] sm:$0xff]
    %v1196 = vld [vmem:[%s1182 + $0x68] sm:$0xff]
    %v1197 = vld [vmem:[%s1182 + $0x70] sm:$0xff]
    %v1198 = vld [vmem:[%s1182 + $0x78] sm:$0xff]
    %1200 = vset.pattern.permute.xlu0 0
    %1201 = vperm.xlu0 %1200, %v1183
    %v1202 = vpop.permute.xlu0 %1201
    %1205 = vset.pattern.permute.xlu0 0
    %1206 = vperm.xlu0 %1205, %v1184
    %v1207 = vpop.permute.xlu0 %1206
    %1210 = vset.pattern.permute.xlu0 0
    %1211 = vperm.xlu0 %1210, %v1185
    %v1212 = vpop.permute.xlu0 %1211
    %1215 = vset.pattern.permute.xlu0 0
    %1216 = vperm.xlu0 %1215, %v1186
    %v1217 = vpop.permute.xlu0 %1216
    %1220 = vset.pattern.permute.xlu0 0
    %1221 = vperm.xlu0 %1220, %v1187
    %v1222 = vpop.permute.xlu0 %1221
    %1225 = vset.pattern.permute.xlu0 0
    %1226 = vperm.xlu0 %1225, %v1188
    %v1227 = vpop.permute.xlu0 %1226
    %1230 = vset.pattern.permute.xlu0 0
    %1231 = vperm.xlu0 %1230, %v1189
    %v1232 = vpop.permute.xlu0 %1231
    %1235 = vset.pattern.permute.xlu0 0
    %1236 = vperm.xlu0 %1235, %v1190
    %v1237 = vpop.permute.xlu0 %1236
    %1240 = vset.pattern.permute.xlu0 0
    %1241 = vperm.xlu0 %1240, %v1191
    %v1242 = vpop.permute.xlu0 %1241
    %1245 = vset.pattern.permute.xlu0 0
    %1246 = vperm.xlu0 %1245, %v1192
    %v1247 = vpop.permute.xlu0 %1246
    %1250 = vset.pattern.permute.xlu0 0
    %1251 = vperm.xlu0 %1250, %v1193
    %v1252 = vpop.permute.xlu0 %1251
    %1255 = vset.pattern.permute.xlu0 0
    %1256 = vperm.xlu0 %1255, %v1194
    %v1257 = vpop.permute.xlu0 %1256
    %1260 = vset.pattern.permute.xlu0 0
    %1261 = vperm.xlu0 %1260, %v1195
    %v1262 = vpop.permute.xlu0 %1261
    %1265 = vset.pattern.permute.xlu0 0
    %1266 = vperm.xlu0 %1265, %v1196
    %v1267 = vpop.permute.xlu0 %1266
    %1270 = vset.pattern.permute.xlu0 0
    %1271 = vperm.xlu0 %1270, %v1197
    %v1272 = vpop.permute.xlu0 %1271
    %1275 = vset.pattern.permute.xlu0 0
    %1276 = vperm.xlu0 %1275, %v1198
    %v1277 = vpop.permute.xlu0 %1276
    %v1279 = vmul.f32 %v1166, %v1202
    %v1280 = vmul.f32 %v1167, %v1207
    %v1281 = vmul.f32 %v1168, %v1212
    %v1282 = vmul.f32 %v1169, %v1217
    %v1283 = vmul.f32 %v1170, %v1222
    %v1284 = vmul.f32 %v1171, %v1227
    %v1285 = vmul.f32 %v1172, %v1232
    %v1286 = vmul.f32 %v1173, %v1237
    %v1287 = vmul.f32 %v1174, %v1242
    %v1288 = vmul.f32 %v1175, %v1247
    %v1289 = vmul.f32 %v1176, %v1252
    %v1290 = vmul.f32 %v1177, %v1257
    %v1291 = vmul.f32 %v1178, %v1262
    %v1292 = vmul.f32 %v1179, %v1267
    %v1293 = vmul.f32 %v1180, %v1272
    %v1294 = vmul.f32 %v1181, %v1277
    %s1295 = scalar_lea.vmem %s3, 6
    %v1296 = vld [vmem:[%s1295] sm:$0x1]
    %v1298 = vperm.slane %v1296, 0
    %v1300 = vmul.f32 %v1279, %v1298
    %v1301 = vmul.f32 %v1280, %v1298
    %v1302 = vmul.f32 %v1281, %v1298
    %v1303 = vmul.f32 %v1282, %v1298
    %v1304 = vmul.f32 %v1283, %v1298
    %v1305 = vmul.f32 %v1284, %v1298
    %v1306 = vmul.f32 %v1285, %v1298
    %v1307 = vmul.f32 %v1286, %v1298
    %v1308 = vmul.f32 %v1287, %v1298
    %v1309 = vmul.f32 %v1288, %v1298
    %v1310 = vmul.f32 %v1289, %v1298
    %v1311 = vmul.f32 %v1290, %v1298
    %v1312 = vmul.f32 %v1291, %v1298
    %v1313 = vmul.f32 %v1292, %v1298
    %v1314 = vmul.f32 %v1293, %v1298
    %v1315 = vmul.f32 %v1294, %v1298
    %v1316 = vadd.f32 %v1150, %v1300
    %v1317 = vadd.f32 %v1151, %v1301
    %v1318 = vadd.f32 %v1152, %v1302
    %v1319 = vadd.f32 %v1153, %v1303
    %v1320 = vadd.f32 %v1154, %v1304
    %v1321 = vadd.f32 %v1155, %v1305
    %v1322 = vadd.f32 %v1156, %v1306
    %v1323 = vadd.f32 %v1157, %v1307
    %v1324 = vadd.f32 %v1158, %v1308
    %v1325 = vadd.f32 %v1159, %v1309
    %v1326 = vadd.f32 %v1160, %v1310
    %v1327 = vadd.f32 %v1161, %v1311
    %v1328 = vadd.f32 %v1162, %v1312
    %v1329 = vadd.f32 %v1163, %v1313
    %v1330 = vadd.f32 %v1164, %v1314
    %v1331 = vadd.f32 %v1165, %v1315
    %v1332 = vld [vmem:[#allocation2 + $0x18] sm:$0xff]
    %v1333 = vld [vmem:[#allocation2 + $0x20] sm:$0xff]
    %v1334 = vld [vmem:[#allocation2 + $0x28] sm:$0xff]
    %v1335 = vld [vmem:[#allocation2 + $0x30] sm:$0xff]
    %v1336 = vld [vmem:[#allocation2 + $0x38] sm:$0xff]
    %v1337 = vld [vmem:[#allocation2 + $0x40] sm:$0xff]
    %v1338 = vld [vmem:[#allocation2 + $0x48] sm:$0xff]
    %v1339 = vld [vmem:[#allocation2 + $0x50] sm:$0xff]
    %v1340 = vld [vmem:[#allocation2 + $0x58] sm:$0xff]
    %v1341 = vld [vmem:[#allocation2 + $0x60] sm:$0xff]
    %v1342 = vld [vmem:[#allocation2 + $0x68] sm:$0xff]
    %v1343 = vld [vmem:[#allocation2 + $0x70] sm:$0xff]
    %v1344 = vld [vmem:[#allocation2 + $0x78] sm:$0xff]
    %v1345 = vld [vmem:[#allocation2 + $0x80] sm:$0xff]
    %v1346 = vld [vmem:[#allocation2 + $0x88] sm:$0xff]
    %v1347 = vld [vmem:[#allocation2 + $0x90] sm:$0xff]
    %s1348 = scalar_lea.vmem %s4, 896
    %v1349 = vld [vmem:[%s1348] sm:$0xff]
    %v1350 = vld [vmem:[%s1348 + $0x8] sm:$0xff]
    %v1351 = vld [vmem:[%s1348 + $0x10] sm:$0xff]
    %v1352 = vld [vmem:[%s1348 + $0x18] sm:$0xff]
    %v1353 = vld [vmem:[%s1348 + $0x20] sm:$0xff]
    %v1354 = vld [vmem:[%s1348 + $0x28] sm:$0xff]
    %v1355 = vld [vmem:[%s1348 + $0x30] sm:$0xff]
    %v1356 = vld [vmem:[%s1348 + $0x38] sm:$0xff]
    %v1357 = vld [vmem:[%s1348 + $0x40] sm:$0xff]
    %v1358 = vld [vmem:[%s1348 + $0x48] sm:$0xff]
    %v1359 = vld [vmem:[%s1348 + $0x50] sm:$0xff]
    %v1360 = vld [vmem:[%s1348 + $0x58] sm:$0xff]
    %v1361 = vld [vmem:[%s1348 + $0x60] sm:$0xff]
    %v1362 = vld [vmem:[%s1348 + $0x68] sm:$0xff]
    %v1363 = vld [vmem:[%s1348 + $0x70] sm:$0xff]
    %v1364 = vld [vmem:[%s1348 + $0x78] sm:$0xff]
    %1366 = vset.pattern.permute.xlu0 0
    %1367 = vperm.xlu0 %1366, %v1349
    %v1368 = vpop.permute.xlu0 %1367
    %1371 = vset.pattern.permute.xlu0 0
    %1372 = vperm.xlu0 %1371, %v1350
    %v1373 = vpop.permute.xlu0 %1372
    %1376 = vset.pattern.permute.xlu0 0
    %1377 = vperm.xlu0 %1376, %v1351
    %v1378 = vpop.permute.xlu0 %1377
    %1381 = vset.pattern.permute.xlu0 0
    %1382 = vperm.xlu0 %1381, %v1352
    %v1383 = vpop.permute.xlu0 %1382
    %1386 = vset.pattern.permute.xlu0 0
    %1387 = vperm.xlu0 %1386, %v1353
    %v1388 = vpop.permute.xlu0 %1387
    %1391 = vset.pattern.permute.xlu0 0
    %1392 = vperm.xlu0 %1391, %v1354
    %v1393 = vpop.permute.xlu0 %1392
    %1396 = vset.pattern.permute.xlu0 0
    %1397 = vperm.xlu0 %1396, %v1355
    %v1398 = vpop.permute.xlu0 %1397
    %1401 = vset.pattern.permute.xlu0 0
    %1402 = vperm.xlu0 %1401, %v1356
    %v1403 = vpop.permute.xlu0 %1402
    %1406 = vset.pattern.permute.xlu0 0
    %1407 = vperm.xlu0 %1406, %v1357
    %v1408 = vpop.permute.xlu0 %1407
    %1411 = vset.pattern.permute.xlu0 0
    %1412 = vperm.xlu0 %1411, %v1358
    %v1413 = vpop.permute.xlu0 %1412
    %1416 = vset.pattern.permute.xlu0 0
    %1417 = vperm.xlu0 %1416, %v1359
    %v1418 = vpop.permute.xlu0 %1417
    %1421 = vset.pattern.permute.xlu0 0
    %1422 = vperm.xlu0 %1421, %v1360
    %v1423 = vpop.permute.xlu0 %1422
    %1426 = vset.pattern.permute.xlu0 0
    %1427 = vperm.xlu0 %1426, %v1361
    %v1428 = vpop.permute.xlu0 %1427
    %1431 = vset.pattern.permute.xlu0 0
    %1432 = vperm.xlu0 %1431, %v1362
    %v1433 = vpop.permute.xlu0 %1432
    %1436 = vset.pattern.permute.xlu0 0
    %1437 = vperm.xlu0 %1436, %v1363
    %v1438 = vpop.permute.xlu0 %1437
    %1441 = vset.pattern.permute.xlu0 0
    %1442 = vperm.xlu0 %1441, %v1364
    %v1443 = vpop.permute.xlu0 %1442
    %v1445 = vmul.f32 %v1332, %v1368
    %v1446 = vmul.f32 %v1333, %v1373
    %v1447 = vmul.f32 %v1334, %v1378
    %v1448 = vmul.f32 %v1335, %v1383
    %v1449 = vmul.f32 %v1336, %v1388
    %v1450 = vmul.f32 %v1337, %v1393
    %v1451 = vmul.f32 %v1338, %v1398
    %v1452 = vmul.f32 %v1339, %v1403
    %v1453 = vmul.f32 %v1340, %v1408
    %v1454 = vmul.f32 %v1341, %v1413
    %v1455 = vmul.f32 %v1342, %v1418
    %v1456 = vmul.f32 %v1343, %v1423
    %v1457 = vmul.f32 %v1344, %v1428
    %v1458 = vmul.f32 %v1345, %v1433
    %v1459 = vmul.f32 %v1346, %v1438
    %v1460 = vmul.f32 %v1347, %v1443
    %s1461 = scalar_lea.vmem %s3, 7
    %v1462 = vld [vmem:[%s1461] sm:$0x1]
    %v1464 = vperm.slane %v1462, 0
    %v1466 = vmul.f32 %v1445, %v1464
    %v1467 = vmul.f32 %v1446, %v1464
    %v1468 = vmul.f32 %v1447, %v1464
    %v1469 = vmul.f32 %v1448, %v1464
    %v1470 = vmul.f32 %v1449, %v1464
    %v1471 = vmul.f32 %v1450, %v1464
    %v1472 = vmul.f32 %v1451, %v1464
    %v1473 = vmul.f32 %v1452, %v1464
    %v1474 = vmul.f32 %v1453, %v1464
    %v1475 = vmul.f32 %v1454, %v1464
    %v1476 = vmul.f32 %v1455, %v1464
    %v1477 = vmul.f32 %v1456, %v1464
    %v1478 = vmul.f32 %v1457, %v1464
    %v1479 = vmul.f32 %v1458, %v1464
    %v1480 = vmul.f32 %v1459, %v1464
    %v1481 = vmul.f32 %v1460, %v1464
    %v1482 = vadd.f32 %v1316, %v1466
    %v1483 = vadd.f32 %v1317, %v1467
    %v1484 = vadd.f32 %v1318, %v1468
    %v1485 = vadd.f32 %v1319, %v1469
    %v1486 = vadd.f32 %v1320, %v1470
    %v1487 = vadd.f32 %v1321, %v1471
    %v1488 = vadd.f32 %v1322, %v1472
    %v1489 = vadd.f32 %v1323, %v1473
    %v1490 = vadd.f32 %v1324, %v1474
    %v1491 = vadd.f32 %v1325, %v1475
    %v1492 = vadd.f32 %v1326, %v1476
    %v1493 = vadd.f32 %v1327, %v1477
    %v1494 = vadd.f32 %v1328, %v1478
    %v1495 = vadd.f32 %v1329, %v1479
    %v1496 = vadd.f32 %v1330, %v1480
    %v1497 = vadd.f32 %v1331, %v1481
    %v1498 = vld [vmem:[#allocation2 + $0x19] sm:$0xff]
    %v1499 = vld [vmem:[#allocation2 + $0x21] sm:$0xff]
    %v1500 = vld [vmem:[#allocation2 + $0x29] sm:$0xff]
    %v1501 = vld [vmem:[#allocation2 + $0x31] sm:$0xff]
    %v1502 = vld [vmem:[#allocation2 + $0x39] sm:$0xff]
    %v1503 = vld [vmem:[#allocation2 + $0x41] sm:$0xff]
    %v1504 = vld [vmem:[#allocation2 + $0x49] sm:$0xff]
    %v1505 = vld [vmem:[#allocation2 + $0x51] sm:$0xff]
    %v1506 = vld [vmem:[#allocation2 + $0x59] sm:$0xff]
    %v1507 = vld [vmem:[#allocation2 + $0x61] sm:$0xff]
    %v1508 = vld [vmem:[#allocation2 + $0x69] sm:$0xff]
    %v1509 = vld [vmem:[#allocation2 + $0x71] sm:$0xff]
    %v1510 = vld [vmem:[#allocation2 + $0x79] sm:$0xff]
    %v1511 = vld [vmem:[#allocation2 + $0x81] sm:$0xff]
    %v1512 = vld [vmem:[#allocation2 + $0x89] sm:$0xff]
    %v1513 = vld [vmem:[#allocation2 + $0x91] sm:$0xff]
    %s1514 = scalar_lea.vmem %s4, 1024
    %v1515 = vld [vmem:[%s1514] sm:$0xff]
    %v1516 = vld [vmem:[%s1514 + $0x8] sm:$0xff]
    %v1517 = vld [vmem:[%s1514 + $0x10] sm:$0xff]
    %v1518 = vld [vmem:[%s1514 + $0x18] sm:$0xff]
    %v1519 = vld [vmem:[%s1514 + $0x20] sm:$0xff]
    %v1520 = vld [vmem:[%s1514 + $0x28] sm:$0xff]
    %v1521 = vld [vmem:[%s1514 + $0x30] sm:$0xff]
    %v1522 = vld [vmem:[%s1514 + $0x38] sm:$0xff]
    %v1523 = vld [vmem:[%s1514 + $0x40] sm:$0xff]
    %v1524 = vld [vmem:[%s1514 + $0x48] sm:$0xff]
    %v1525 = vld [vmem:[%s1514 + $0x50] sm:$0xff]
    %v1526 = vld [vmem:[%s1514 + $0x58] sm:$0xff]
    %v1527 = vld [vmem:[%s1514 + $0x60] sm:$0xff]
    %v1528 = vld [vmem:[%s1514 + $0x68] sm:$0xff]
    %v1529 = vld [vmem:[%s1514 + $0x70] sm:$0xff]
    %v1530 = vld [vmem:[%s1514 + $0x78] sm:$0xff]
    %1532 = vset.pattern.permute.xlu0 0
    %1533 = vperm.xlu0 %1532, %v1515
    %v1534 = vpop.permute.xlu0 %1533
    %1537 = vset.pattern.permute.xlu0 0
    %1538 = vperm.xlu0 %1537, %v1516
    %v1539 = vpop.permute.xlu0 %1538
    %1542 = vset.pattern.permute.xlu0 0
    %1543 = vperm.xlu0 %1542, %v1517
    %v1544 = vpop.permute.xlu0 %1543
    %1547 = vset.pattern.permute.xlu0 0
    %1548 = vperm.xlu0 %1547, %v1518
    %v1549 = vpop.permute.xlu0 %1548
    %1552 = vset.pattern.permute.xlu0 0
    %1553 = vperm.xlu0 %1552, %v1519
    %v1554 = vpop.permute.xlu0 %1553
    %1557 = vset.pattern.permute.xlu0 0
    %1558 = vperm.xlu0 %1557, %v1520
    %v1559 = vpop.permute.xlu0 %1558
    %1562 = vset.pattern.permute.xlu0 0
    %1563 = vperm.xlu0 %1562, %v1521
    %v1564 = vpop.permute.xlu0 %1563
    %1567 = vset.pattern.permute.xlu0 0
    %1568 = vperm.xlu0 %1567, %v1522
    %v1569 = vpop.permute.xlu0 %1568
    %1572 = vset.pattern.permute.xlu0 0
    %1573 = vperm.xlu0 %1572, %v1523
    %v1574 = vpop.permute.xlu0 %1573
    %1577 = vset.pattern.permute.xlu0 0
    %1578 = vperm.xlu0 %1577, %v1524
    %v1579 = vpop.permute.xlu0 %1578
    %1582 = vset.pattern.permute.xlu0 0
    %1583 = vperm.xlu0 %1582, %v1525
    %v1584 = vpop.permute.xlu0 %1583
    %1587 = vset.pattern.permute.xlu0 0
    %1588 = vperm.xlu0 %1587, %v1526
    %v1589 = vpop.permute.xlu0 %1588
    %1592 = vset.pattern.permute.xlu0 0
    %1593 = vperm.xlu0 %1592, %v1527
    %v1594 = vpop.permute.xlu0 %1593
    %1597 = vset.pattern.permute.xlu0 0
    %1598 = vperm.xlu0 %1597, %v1528
    %v1599 = vpop.permute.xlu0 %1598
    %1602 = vset.pattern.permute.xlu0 0
    %1603 = vperm.xlu0 %1602, %v1529
    %v1604 = vpop.permute.xlu0 %1603
    %1607 = vset.pattern.permute.xlu0 0
    %1608 = vperm.xlu0 %1607, %v1530
    %v1609 = vpop.permute.xlu0 %1608
    %v1611 = vmul.f32 %v1498, %v1534
    %v1612 = vmul.f32 %v1499, %v1539
    %v1613 = vmul.f32 %v1500, %v1544
    %v1614 = vmul.f32 %v1501, %v1549
    %v1615 = vmul.f32 %v1502, %v1554
    %v1616 = vmul.f32 %v1503, %v1559
    %v1617 = vmul.f32 %v1504, %v1564
    %v1618 = vmul.f32 %v1505, %v1569
    %v1619 = vmul.f32 %v1506, %v1574
    %v1620 = vmul.f32 %v1507, %v1579
    %v1621 = vmul.f32 %v1508, %v1584
    %v1622 = vmul.f32 %v1509, %v1589
    %v1623 = vmul.f32 %v1510, %v1594
    %v1624 = vmul.f32 %v1511, %v1599
    %v1625 = vmul.f32 %v1512, %v1604
    %v1626 = vmul.f32 %v1513, %v1609
    %s1627 = scalar_lea.vmem %s3, 8
    %v1628 = vld [vmem:[%s1627] sm:$0x1]
    %v1630 = vperm.slane %v1628, 0
    %v1632 = vmul.f32 %v1611, %v1630
    %v1633 = vmul.f32 %v1612, %v1630
    %v1634 = vmul.f32 %v1613, %v1630
    %v1635 = vmul.f32 %v1614, %v1630
    %v1636 = vmul.f32 %v1615, %v1630
    %v1637 = vmul.f32 %v1616, %v1630
    %v1638 = vmul.f32 %v1617, %v1630
    %v1639 = vmul.f32 %v1618, %v1630
    %v1640 = vmul.f32 %v1619, %v1630
    %v1641 = vmul.f32 %v1620, %v1630
    %v1642 = vmul.f32 %v1621, %v1630
    %v1643 = vmul.f32 %v1622, %v1630
    %v1644 = vmul.f32 %v1623, %v1630
    %v1645 = vmul.f32 %v1624, %v1630
    %v1646 = vmul.f32 %v1625, %v1630
    %v1647 = vmul.f32 %v1626, %v1630
    %v1648 = vadd.f32 %v1482, %v1632
    %v1649 = vadd.f32 %v1483, %v1633
    %v1650 = vadd.f32 %v1484, %v1634
    %v1651 = vadd.f32 %v1485, %v1635
    %v1652 = vadd.f32 %v1486, %v1636
    %v1653 = vadd.f32 %v1487, %v1637
    %v1654 = vadd.f32 %v1488, %v1638
    %v1655 = vadd.f32 %v1489, %v1639
    %v1656 = vadd.f32 %v1490, %v1640
    %v1657 = vadd.f32 %v1491, %v1641
    %v1658 = vadd.f32 %v1492, %v1642
    %v1659 = vadd.f32 %v1493, %v1643
    %v1660 = vadd.f32 %v1494, %v1644
    %v1661 = vadd.f32 %v1495, %v1645
    %v1662 = vadd.f32 %v1496, %v1646
    %v1663 = vadd.f32 %v1497, %v1647
    %v1664 = vld [vmem:[%s5] sm:$0xff]
    %v1665 = vld [vmem:[%s5 + $0x8] sm:$0xff]
    %v1666 = vld [vmem:[%s5 + $0x10] sm:$0xff]
    %v1667 = vld [vmem:[%s5 + $0x18] sm:$0xff]
    %v1668 = vld [vmem:[%s5 + $0x20] sm:$0xff]
    %v1669 = vld [vmem:[%s5 + $0x28] sm:$0xff]
    %v1670 = vld [vmem:[%s5 + $0x30] sm:$0xff]
    %v1671 = vld [vmem:[%s5 + $0x38] sm:$0xff]
    %v1672 = vld [vmem:[%s5 + $0x40] sm:$0xff]
    %v1673 = vld [vmem:[%s5 + $0x48] sm:$0xff]
    %v1674 = vld [vmem:[%s5 + $0x50] sm:$0xff]
    %v1675 = vld [vmem:[%s5 + $0x58] sm:$0xff]
    %v1676 = vld [vmem:[%s5 + $0x60] sm:$0xff]
    %v1677 = vld [vmem:[%s5 + $0x68] sm:$0xff]
    %v1678 = vld [vmem:[%s5 + $0x70] sm:$0xff]
    %v1679 = vld [vmem:[%s5 + $0x78] sm:$0xff]
    %v1680 = vadd.f32 %v1648, %v1664
    %v1681 = vadd.f32 %v1649, %v1665
    %v1682 = vadd.f32 %v1650, %v1666
    %v1683 = vadd.f32 %v1651, %v1667
    %v1684 = vadd.f32 %v1652, %v1668
    %v1685 = vadd.f32 %v1653, %v1669
    %v1686 = vadd.f32 %v1654, %v1670
    %v1687 = vadd.f32 %v1655, %v1671
    %v1688 = vadd.f32 %v1656, %v1672
    %v1689 = vadd.f32 %v1657, %v1673
    %v1690 = vadd.f32 %v1658, %v1674
    %v1691 = vadd.f32 %v1659, %v1675
    %v1692 = vadd.f32 %v1660, %v1676
    %v1693 = vadd.f32 %v1661, %v1677
    %v1694 = vadd.f32 %v1662, %v1678
    %v1695 = vadd.f32 %v1663, %v1679
    %v1696 = vmax.f32 %v1680, 0.0
    %v1697 = vmax.f32 %v1681, 0.0
    %v1698 = vmax.f32 %v1682, 0.0
    %v1699 = vmax.f32 %v1683, 0.0
    %v1700 = vmax.f32 %v1684, 0.0
    %v1701 = vmax.f32 %v1685, 0.0
    %v1702 = vmax.f32 %v1686, 0.0
    %v1703 = vmax.f32 %v1687, 0.0
    %v1704 = vmax.f32 %v1688, 0.0
    %v1705 = vmax.f32 %v1689, 0.0
    %v1706 = vmax.f32 %v1690, 0.0
    %v1707 = vmax.f32 %v1691, 0.0
    %v1708 = vmax.f32 %v1692, 0.0
    %v1709 = vmax.f32 %v1693, 0.0
    %v1710 = vmax.f32 %v1694, 0.0
    %v1711 = vmax.f32 %v1695, 0.0
    %v1712 = vpack.c.bf16 %v1697, %v1696
    %v1713 = vpack.c.bf16 %v1699, %v1698
    %v1714 = vpack.c.bf16 %v1701, %v1700
    %v1715 = vpack.c.bf16 %v1703, %v1702
    %v1716 = vpack.c.bf16 %v1705, %v1704
    %v1717 = vpack.c.bf16 %v1707, %v1706
    %v1718 = vpack.c.bf16 %v1709, %v1708
    %v1719 = vpack.c.bf16 %v1711, %v1710
    %v1720 = vld [vmem:[%s2] sm:$0xf]
    %v1721 = vld [vmem:[%s2 + $0x4] sm:$0xf]
    %v1722 = vld [vmem:[%s2 + $0x8] sm:$0xf]
    %v1723 = vld [vmem:[%s2 + $0xc] sm:$0xf]
    %v1724 = vld [vmem:[%s2 + $0x10] sm:$0xf]
    %v1725 = vld [vmem:[%s2 + $0x14] sm:$0xf]
    %v1726 = vld [vmem:[%s2 + $0x18] sm:$0xf]
    %v1727 = vld [vmem:[%s2 + $0x1c] sm:$0xf]
    %v1728 = vld [vmem:[%s2 + $0x20] sm:$0xf]
    %v1729 = vld [vmem:[%s2 + $0x24] sm:$0xf]
    %v1730 = vld [vmem:[%s2 + $0x28] sm:$0xf]
    %v1731 = vld [vmem:[%s2 + $0x2c] sm:$0xf]
    %v1732 = vld [vmem:[%s2 + $0x30] sm:$0xf]
    %v1733 = vld [vmem:[%s2 + $0x34] sm:$0xf]
    %v1734 = vld [vmem:[%s2 + $0x38] sm:$0xf]
    %v1735 = vld [vmem:[%s2 + $0x3c] sm:$0xf]
    %v1736 = vld [vmem:[%s6] sm:$0x1]
    %v1738 = vperm.slane %v1736, 0
    %v1756 = vunpack.c.l.b16 %v1720
    %v1757 = vunpack.c.l.b16 %v1721
    %v1758 = vunpack.c.l.b16 %v1722
    %v1759 = vunpack.c.l.b16 %v1723
    %v1760 = vunpack.c.l.b16 %v1724
    %v1761 = vunpack.c.l.b16 %v1725
    %v1762 = vunpack.c.l.b16 %v1726
    %v1763 = vunpack.c.l.b16 %v1727
    %v1764 = vunpack.c.l.b16 %v1728
    %v1765 = vunpack.c.l.b16 %v1729
    %v1766 = vunpack.c.l.b16 %v1730
    %v1767 = vunpack.c.l.b16 %v1731
    %v1768 = vunpack.c.l.b16 %v1732
    %v1769 = vunpack.c.l.b16 %v1733
    %v1770 = vunpack.c.l.b16 %v1734
    %v1771 = vunpack.c.l.b16 %v1735
    %v1772 = vpack.c.b16 %v1757, %v1756
    %v1773 = vpack.c.b16 %v1759, %v1758
    %v1774 = vpack.c.b16 %v1761, %v1760
    %v1775 = vpack.c.b16 %v1763, %v1762
    %v1776 = vpack.c.b16 %v1765, %v1764
    %v1777 = vpack.c.b16 %v1767, %v1766
    %v1778 = vpack.c.b16 %v1769, %v1768
    %v1779 = vpack.c.b16 %v1771, %v1770
    %1788 = vmatpush.bf16.msra.mxu0 %v1779
    %1789 = vmatpush.bf16.msra.mxu0 %v1778
    %1790 = vmatpush.bf16.msra.mxu0 %v1777
    %1791 = vmatpush.bf16.msra.mxu0 %v1776
    %1792 = vmatpush.bf16.msra.mxu0 %v1775
    %1793 = vmatpush.bf16.msra.mxu0 %v1774
    %1794 = vmatpush.bf16.msra.mxu0 %v1773
    %1795 = vmatpush.bf16.msra.mxu0 %v1772
    %1796 = vmatmul.bf16.gmra.mxu0 %v1712
    %v1797 = vpop.f32.mrf.mxu0
    %v1798 = vadd.f32 %v1738, %v1797
    %v1799 = vpop.f32.mrf.mxu0
    %v1800 = vadd.f32 %v1738, %v1799
    %1801 = vmatmul.bf16.gmra.mxu0 %v1713
    %v1802 = vpop.f32.mrf.mxu0
    %v1803 = vadd.f32 %v1738, %v1802
    %v1804 = vpop.f32.mrf.mxu0
    %v1805 = vadd.f32 %v1738, %v1804
    %1806 = vmatmul.bf16.gmra.mxu0 %v1714
    %v1807 = vpop.f32.mrf.mxu0
    %v1808 = vadd.f32 %v1738, %v1807
    %v1809 = vpop.f32.mrf.mxu0
    %v1810 = vadd.f32 %v1738, %v1809
    %1811 = vmatmul.bf16.gmra.mxu0 %v1715
    %v1812 = vpop.f32.mrf.mxu0
    %v1813 = vadd.f32 %v1738, %v1812
    %v1814 = vpop.f32.mrf.mxu0
    %v1815 = vadd.f32 %v1738, %v1814
    %1816 = vmatmul.bf16.gmra.mxu0 %v1716
    %v1817 = vpop.f32.mrf.mxu0
    %v1818 = vadd.f32 %v1738, %v1817
    %v1819 = vpop.f32.mrf.mxu0
    %v1820 = vadd.f32 %v1738, %v1819
    %1821 = vmatmul.bf16.gmra.mxu0 %v1717
    %v1822 = vpop.f32.mrf.mxu0
    %v1823 = vadd.f32 %v1738, %v1822
    %v1824 = vpop.f32.mrf.mxu0
    %v1825 = vadd.f32 %v1738, %v1824
    %1826 = vmatmul.bf16.gmra.mxu0 %v1718
    %v1827 = vpop.f32.mrf.mxu0
    %v1828 = vadd.f32 %v1738, %v1827
    %v1829 = vpop.f32.mrf.mxu0
    %v1830 = vadd.f32 %v1738, %v1829
    %1831 = vmatmul.bf16.gmra.mxu0 %v1719
    %v1832 = vpop.f32.mrf.mxu0
    %v1833 = vadd.f32 %v1738, %v1832
    %v1834 = vpop.f32.mrf.mxu0
    %v1835 = vadd.f32 %v1738, %v1834
    %1836 = vdwg.mxu0
    %1837 = vst [vmem:[#allocation3] sm:$0xff] %v1798
    %1838 = vst [vmem:[#allocation3 + $0x8] sm:$0xff] %v1800
    %1839 = vst [vmem:[#allocation3 + $0x10] sm:$0xff] %v1803
    %1840 = vst [vmem:[#allocation3 + $0x18] sm:$0xff] %v1805
    %1841 = vst [vmem:[#allocation3 + $0x20] sm:$0xff] %v1808
    %1842 = vst [vmem:[#allocation3 + $0x28] sm:$0xff] %v1810
    %1843 = vst [vmem:[#allocation3 + $0x30] sm:$0xff] %v1813
    %1844 = vst [vmem:[#allocation3 + $0x38] sm:$0xff] %v1815
    %1845 = vst [vmem:[#allocation3 + $0x40] sm:$0xff] %v1818
    %1846 = vst [vmem:[#allocation3 + $0x48] sm:$0xff] %v1820
    %1847 = vst [vmem:[#allocation3 + $0x50] sm:$0xff] %v1823
    %1848 = vst [vmem:[#allocation3 + $0x58] sm:$0xff] %v1825
    %1849 = vst [vmem:[#allocation3 + $0x60] sm:$0xff] %v1828
    %1850 = vst [vmem:[#allocation3 + $0x68] sm:$0xff] %v1830
    %1851 = vst [vmem:[#allocation3 + $0x70] sm:$0xff] %v1833
    %1852 = vst [vmem:[#allocation3 + $0x78] sm:$0xff] %v1835
    // Predicated region
    $region34: #{tpu_custom_call.1} parent=1 // pred_check
      _
    $region35: #{tpu_custom_call.1} parent=1 // pred_check_branch
      %1854 = sbr.rel (0) target = $region37
    $region36: #{tpu_custom_call.1} parent=1 // pred_region
      %1856 = vsyncadd [#allocation4], 0
      %s1857 = sshll.u32 [#allocation3], 4
      %s1858 = int_to_ptr.vmem [resolvable:$true] %s1857
      %s1859 = sshll.u32 %s7, 4
      %s1860 = int_to_ptr.hbm [resolvable:$true] %s1859
      %1865 = dma.vmem_to_hbm [thread:$0]  %s1858, 2048, %s1860, [#allocation4], 128, 128, 8
    $region37: #{tpu_custom_call.1} parent=1 // pred_fallthru
      _
    // Predicated region
    $region38: #{tpu_custom_call.1} parent=1 // pred_check
      _
    $region39: #{tpu_custom_call.1} parent=1 // pred_check_branch
      %1867 = sbr.rel (0) target = $region41
    $region40: #{tpu_custom_call.1} parent=1 // pred_region
      %1869 = dma.done [#allocation4], 2048
    $region41: #{tpu_custom_call.1} parent=1 // pred_fallthru
      _
    %1870 = vsyncpa [#allocation4], 1

</llo_original>
